<compile_context>
chip_gen: v6e
topology: v6e:2x2x1
jax: 0.10.0
libtpu: 0.0.40
codegen_flags: <defaults>
</compile_context>

<pallas_src>
import functools

import jax
import jax.numpy as jnp
from jax.experimental import pallas as pl
from jax.experimental.pallas import tpu as pltpu

# ---- tiny BERT config (bert-base scaled down) ----
VOCAB = 128
HIDDEN = 32
NUM_HEADS = 2
HEAD_DIM = HIDDEN // NUM_HEADS
INTERMEDIATE = 64
NUM_LAYERS = 2
MAX_POS = 16
TYPE_VOCAB = 2
LN_EPS = 1e-12


def _layernorm(x, g, b):
    mu = jnp.mean(x, axis=-1, keepdims=True)
    var = jnp.mean((x - mu) ** 2, axis=-1, keepdims=True)
    return (x - mu) * jax.lax.rsqrt(var + LN_EPS) * g + b


# ----------------------------------------------------------------------------
# Single fused kernel: embeddings -> L encoder layers -> pooler -> fc
# Grid = (NUM_LAYERS,); residual stream x lives in VMEM scratch across steps.
# ----------------------------------------------------------------------------
def _model_kernel(ids_ref,                                   # SMEM: [B*S] int32 (scalar prefetch)
                  mask_ref, word_ref, pos_ref, type_ref,
                  emb_g_ref, emb_b_ref,
                  qkv_w_ref, qkv_b_ref, o_w_ref, o_b_ref,
                  ln1_g_ref, ln1_b_ref,
                  ff1_w_ref, ff1_b_ref, ff2_w_ref, ff2_b_ref,
                  ln2_g_ref, ln2_b_ref,
                  pool_w_ref, pool_b_ref, fc_w_ref, fc_b_ref,
                  out_ref,                                   # [B, 1] f32
                  x_ref,                                     # VMEM scratch [B*S, H] f32 (residual)
                  *, num_heads, head_dim, seq_len, batch):
    bf = jnp.bfloat16
    H = num_heads * head_dim
    BS = batch * seq_len
    l = pl.program_id(0)

    # ---- embeddings (word gather + pos + type + LayerNorm) only at layer 0 ----
    @pl.when(l == 0)
    def _embed():
        for i in range(BS):                                  # unrolled row gather (BS is small)
            tok = ids_ref[i]
            x_ref[pl.ds(i, 1), :] = word_ref[pl.ds(tok, 1), :]
        emb = x_ref[...] + pos_ref[...] + type_ref[...]
        x_ref[...] = _layernorm(emb, emb_g_ref[...], emb_b_ref[...])

    # ---- encoder layer l (reads / writes the VMEM-resident residual stream) ----
    x = x_ref[...]                                           # [BS, H] f32
    xb = x.astype(bf)

    # fused QKV projection (bf16 operands, f32 accumulation)
    qkv = jnp.dot(xb, qkv_w_ref[0], preferred_element_type=jnp.float32) + qkv_b_ref[0]

    mask = mask_ref[...]                                     # [BS, BS] additive (block-diag + padding)
    o_w = o_w_ref[0]                                         # [H, H] bf16
    scale = 1.0 / float(head_dim) ** 0.5

    # per-head attention; output projection accumulated per head (no lane-axis concat)
    attn = None
    for h in range(num_heads):
        q_h = (qkv[:, h * head_dim:(h + 1) * head_dim] * scale).astype(bf)
        k_h = qkv[:, H + h * head_dim: H + (h + 1) * head_dim].astype(bf)
        v_h = qkv[:, 2 * H + h * head_dim: 2 * H + (h + 1) * head_dim].astype(bf)
        s = jax.lax.dot_general(q_h, k_h, (((1,), (1,)), ((), ())),
                                preferred_element_type=jnp.float32)      # [BS, BS]
        s = s + mask
        s = s - jnp.max(s, axis=-1, keepdims=True)
        p = jnp.exp(s)
        p = p / jnp.sum(p, axis=-1, keepdims=True)           # exact softmax (no approx reciprocal)
        ctx_h = jnp.dot(p.astype(bf), v_h, preferred_element_type=jnp.float32)    # [BS, hd]
        part = jnp.dot(ctx_h.astype(bf), o_w[h * head_dim:(h + 1) * head_dim, :],
                       preferred_element_type=jnp.float32)               # [BS, H]
        attn = part if attn is None else attn + part
    attn = attn + o_b_ref[0]

    # add & LayerNorm (attention dropout -> identity)
    x1 = _layernorm(attn + x, ln1_g_ref[0], ln1_b_ref[0])

    # FFN (intermediate activation never leaves vregs/VMEM)
    h1 = jnp.dot(x1.astype(bf), ff1_w_ref[0], preferred_element_type=jnp.float32) + ff1_b_ref[0]
    h1 = jax.nn.gelu(h1, approximate=True)   # TODO(synk): bert-base uses exact erf GELU
    ffn = jnp.dot(h1.astype(bf), ff2_w_ref[0], preferred_element_type=jnp.float32) + ff2_b_ref[0]
    x_ref[...] = _layernorm(ffn + x1, ln2_g_ref[0], ln2_b_ref[0])

    # ---- pooler (CLS dense + tanh) + dropout(identity) + fc at last layer ----
    @pl.when(l == pl.num_programs(0) - 1)
    def _head():
        xf = x_ref[...]
        cls = jnp.concatenate([xf[b * seq_len: b * seq_len + 1, :] for b in range(batch)],
                              axis=0)                                     # [B, H] CLS rows
        pooled = jnp.tanh(
            jnp.dot(cls.astype(bf), pool_w_ref[...], preferred_element_type=jnp.float32)
            + pool_b_ref[...])
        # nn.Dropout(0.1): identity at inference.
        logits = jnp.sum(pooled * fc_w_ref[...], axis=-1, keepdims=True) + fc_b_ref[...]
        out_ref[...] = logits


# ----------------------------------------------------------------------------
# Forward: single pallas_call for the whole model
# ----------------------------------------------------------------------------
def survey_classifier_forward(params, input_ids, attention_mask):
    B, S = input_ids.shape
    H, I, L = HIDDEN, INTERMEDIATE, NUM_LAYERS
    BS = B * S

    ids_flat = input_ids.reshape(BS).astype(jnp.int32)

    # Block-diagonal additive mask over the flattened [B*S] token axis:
    # 0 where (same sequence AND key unpadded), else -10000 (HF semantics; masked
    # probabilities underflow to exactly 0 in f32, matching per-sequence softmax).
    key_ok = attention_mask.astype(jnp.float32).reshape(BS)
    seq_of = jnp.repeat(jnp.arange(B, dtype=jnp.int32), S)
    allowed = (seq_of[:, None] == seq_of[None, :]).astype(jnp.float32) * key_ok[None, :]
    add_mask = (allowed - 1.0) * 10000.0                                  # [BS, BS]

    pos_tok = jnp.tile(params["pos_emb"][:S], (B, 1))                     # [BS, H]
    # forward() never passes token_type_ids -> HF defaults them to zeros -> row 0.
    type_row = params["type_emb"][0:1]                                    # [1, H]

    kernel = functools.partial(_model_kernel, num_heads=NUM_HEADS, head_dim=HEAD_DIM,
                               seq_len=S, batch=B)

    c2 = lambda l, ids: (0, 0)        # constant-index (loaded once, stays in VMEM)
    l3 = lambda l, ids: (l, 0, 0)     # per-layer stacked weights

    grid_spec = pltpu.PrefetchScalarGridSpec(
        num_scalar_prefetch=1,
        grid=(L,),
        in_specs=[
            pl.BlockSpec((BS, BS), c2),          # additive mask
            pl.BlockSpec((VOCAB, H), c2),        # word embedding table (f32, gathered)
            pl.BlockSpec((BS, H), c2),           # per-token position embeddings
            pl.BlockSpec((1, H), c2),            # token-type row 0
            pl.BlockSpec((1, H), c2),            # embedding LN gamma
            pl.BlockSpec((1, H), c2),            # embedding LN beta
            pl.BlockSpec((1, H, 3 * H), l3),     # qkv_w   [L,H,3H] bf16
            pl.BlockSpec((1, 1, 3 * H), l3),     # qkv_b
            pl.BlockSpec((1, H, H), l3),         # o_w     bf16
            pl.BlockSpec((1, 1, H), l3),         # o_b
            pl.BlockSpec((1, 1, H), l3),         # ln1_g
            pl.BlockSpec((1, 1, H), l3),         # ln1_b
            pl.BlockSpec((1, H, I), l3),         # ff1_w   bf16
            pl.BlockSpec((1, 1, I), l3),         # ff1_b
            pl.BlockSpec((1, I, H), l3),         # ff2_w   bf16
            pl.BlockSpec((1, 1, H), l3),         # ff2_b
            pl.BlockSpec((1, 1, H), l3),         # ln2_g
            pl.BlockSpec((1, 1, H), l3),         # ln2_b
            pl.BlockSpec((H, H), c2),            # pooler w bf16
            pl.BlockSpec((1, H), c2),            # pooler b
            pl.BlockSpec((1, H), c2),            # fc weight as a lane-dense row (f32)
            pl.BlockSpec((1, 1), c2),            # fc bias
        ],
        out_specs=pl.BlockSpec((B, 1), c2),
        scratch_shapes=[pltpu.VMEM((BS, H), jnp.float32)],   # residual stream
    )

    return pl.pallas_call(
        kernel,
        out_shape=jax.ShapeDtypeStruct((B, 1), jnp.float32),
        grid_spec=grid_spec,
        compiler_params=pltpu.CompilerParams(dimension_semantics=("arbitrary",)),
    )(ids_flat, add_mask, params["word_emb"], pos_tok, type_row,
      params["emb_ln_g"], params["emb_ln_b"],
      params["qkv_w"], params["qkv_b"], params["o_w"], params["o_b"],
      params["ln1_g"], params["ln1_b"],
      params["ff1_w"], params["ff1_b"], params["ff2_w"], params["ff2_b"],
      params["ln2_g"], params["ln2_b"],
      params["pool_w"], params["pool_b"], params["fc_w"], params["fc_b"])


# ----------------------------------------------------------------------------
# Deterministic parameter init (stands in for pretrained bert-base-uncased).
# Per-layer weights are stacked [L, ...]; matmul weights are pre-cast to bf16 ONCE.
# ----------------------------------------------------------------------------
def init_params(key):
    H, I, L = HIDDEN, INTERMEDIATE, NUM_LAYERS
    bf = jnp.bfloat16
    keys = jax.random.split(key, 6)

    def rnd(k, shape):
        return jax.random.normal(k, shape, jnp.float32) * 0.02

    params = {
        "word_emb": rnd(keys[0], (VOCAB, H)),
        "pos_emb": rnd(keys[1], (MAX_POS, H)),
        "type_emb": rnd(keys[2], (TYPE_VOCAB, H)),
        "emb_ln_g": jnp.ones((1, H), jnp.float32),
        "emb_ln_b": jnp.zeros((1, H), jnp.float32),
        "pool_w": rnd(keys[3], (H, H)).astype(bf),
        "pool_b": jnp.zeros((1, H), jnp.float32),
        "fc_w": rnd(keys[4], (1, H)),            # stored as a row; used in a VPU lane reduction
        "fc_b": jnp.zeros((1, 1), jnp.float32),
    }

    lkeys = jax.random.split(keys[5], 4 * L)
    params["qkv_w"] = jnp.stack([rnd(lkeys[4 * i + 0], (H, 3 * H)) for i in range(L)]).astype(bf)
    params["o_w"]   = jnp.stack([rnd(lkeys[4 * i + 1], (H, H)) for i in range(L)]).astype(bf)
    params["ff1_w"] = jnp.stack([rnd(lkeys[4 * i + 2], (H, I)) for i in range(L)]).astype(bf)
    params["ff2_w"] = jnp.stack([rnd(lkeys[4 * i + 3], (I, H)) for i in range(L)]).astype(bf)
    params["qkv_b"] = jnp.zeros((L, 1, 3 * H), jnp.float32)
    params["o_b"]   = jnp.zeros((L, 1, H), jnp.float32)
    params["ff1_b"] = jnp.zeros((L, 1, I), jnp.float32)
    params["ff2_b"] = jnp.zeros((L, 1, H), jnp.float32)
    params["ln1_g"] = jnp.ones((L, 1, H), jnp.float32)
    params["ln1_b"] = jnp.zeros((L, 1, H), jnp.float32)
    params["ln2_g"] = jnp.ones((L, 1, H), jnp.float32)
    params["ln2_b"] = jnp.zeros((L, 1, H), jnp.float32)
    return params


if __name__ == "__main__":
    B, S = 2, 8
    key = jax.random.PRNGKey(0)
    k_param, k_ids = jax.random.split(key)

    params = init_params(k_param)
    input_ids = jax.random.randint(k_ids, (B, S), 0, VOCAB, dtype=jnp.int32)
    # second sequence has two padding tokens -> exercises the attention mask
    attention_mask = jnp.array(
        [[1, 1, 1, 1, 1, 1, 1, 1],
         [1, 1, 1, 1, 1, 1, 0, 0]], dtype=jnp.int32)

    fwd = jax.jit(survey_classifier_forward)
    logits = jax.block_until_ready(fwd(params, input_ids, attention_mask))
    assert logits.shape == (B, 1) and logits.dtype == jnp.float32
    assert bool(jnp.all(jnp.isfinite(logits)))
    print("KERNEL_OK")
</pallas_src>

<mosaic_0001>
module attributes {stable_mosaic.version = 11 : i64} {
  func.func @_model_kernel(%arg0: i32, %arg1: memref<16xi32, #tpu.memory_space<smem>>, %arg2: memref<16x16xf32, #tpu.memory_space<vmem>>, %arg3: memref<128x32xf32, #tpu.memory_space<vmem>>, %arg4: memref<16x32xf32, #tpu.memory_space<vmem>>, %arg5: memref<1x32xf32, #tpu.memory_space<vmem>>, %arg6: memref<1x32xf32, #tpu.memory_space<vmem>>, %arg7: memref<1x32xf32, #tpu.memory_space<vmem>>, %arg8: memref<1x32x96xbf16, #tpu.memory_space<vmem>>, %arg9: memref<1x1x96xf32, #tpu.memory_space<vmem>>, %arg10: memref<1x32x32xbf16, #tpu.memory_space<vmem>>, %arg11: memref<1x1x32xf32, #tpu.memory_space<vmem>>, %arg12: memref<1x1x32xf32, #tpu.memory_space<vmem>>, %arg13: memref<1x1x32xf32, #tpu.memory_space<vmem>>, %arg14: memref<1x32x64xbf16, #tpu.memory_space<vmem>>, %arg15: memref<1x1x64xf32, #tpu.memory_space<vmem>>, %arg16: memref<1x64x32xbf16, #tpu.memory_space<vmem>>, %arg17: memref<1x1x32xf32, #tpu.memory_space<vmem>>, %arg18: memref<1x1x32xf32, #tpu.memory_space<vmem>>, %arg19: memref<1x1x32xf32, #tpu.memory_space<vmem>>, %arg20: memref<32x32xbf16, #tpu.memory_space<vmem>>, %arg21: memref<1x32xf32, #tpu.memory_space<vmem>>, %arg22: memref<1x32xf32, #tpu.memory_space<vmem>>, %arg23: memref<1x1xf32, #tpu.memory_space<vmem>>, %arg24: memref<2x1xf32, #tpu.memory_space<vmem>>, %arg25: memref<16x32xf32, #tpu.memory_space<vmem>>) attributes {dimension_semantics = [#tpu.dimension_semantics<arbitrary>], iteration_bounds = array<i64: 2>, scalar_prefetch = 1 : i64, scratch_operands = 1 : i64, tpu.core_type = #tpu.core_type<tc>, window_params = [{pipeline_mode = #tpu.pipeline_mode<synchronous>, transform_indices = @transform_0, window_bounds = array<i64: 16, 16>}, {pipeline_mode = #tpu.pipeline_mode<synchronous>, transform_indices = @transform_1, window_bounds = array<i64: 128, 32>}, {pipeline_mode = #tpu.pipeline_mode<synchronous>, transform_indices = @transform_2, window_bounds = array<i64: 16, 32>}, {pipeline_mode = #tpu.pipeline_mode<synchronous>, transform_indices = @transform_3, window_bounds = array<i64: 1, 32>}, {pipeline_mode = #tpu.pipeline_mode<synchronous>, transform_indices = @transform_4, window_bounds = array<i64: 1, 32>}, {pipeline_mode = #tpu.pipeline_mode<synchronous>, transform_indices = @transform_5, window_bounds = array<i64: 1, 32>}, {transform_indices = @transform_6, window_bounds = array<i64: 1, 32, 96>}, {transform_indices = @transform_7, window_bounds = array<i64: 1, 1, 96>}, {transform_indices = @transform_8, window_bounds = array<i64: 1, 32, 32>}, {transform_indices = @transform_9, window_bounds = array<i64: 1, 1, 32>}, {transform_indices = @transform_10, window_bounds = array<i64: 1, 1, 32>}, {transform_indices = @transform_11, window_bounds = array<i64: 1, 1, 32>}, {transform_indices = @transform_12, window_bounds = array<i64: 1, 32, 64>}, {transform_indices = @transform_13, window_bounds = array<i64: 1, 1, 64>}, {transform_indices = @transform_14, window_bounds = array<i64: 1, 64, 32>}, {transform_indices = @transform_15, window_bounds = array<i64: 1, 1, 32>}, {transform_indices = @transform_16, window_bounds = array<i64: 1, 1, 32>}, {transform_indices = @transform_17, window_bounds = array<i64: 1, 1, 32>}, {pipeline_mode = #tpu.pipeline_mode<synchronous>, transform_indices = @transform_18, window_bounds = array<i64: 32, 32>}, {pipeline_mode = #tpu.pipeline_mode<synchronous>, transform_indices = @transform_19, window_bounds = array<i64: 1, 32>}, {pipeline_mode = #tpu.pipeline_mode<synchronous>, transform_indices = @transform_20, window_bounds = array<i64: 1, 32>}, {pipeline_mode = #tpu.pipeline_mode<synchronous>, transform_indices = @transform_21, window_bounds = array<i64: 1, 1>}, {pipeline_mode = #tpu.pipeline_mode<synchronous>, transform_indices = @transform_22, window_bounds = array<i64: 2, 1>}]} {
    %c0_i32 = arith.constant 0 : i32
    %0 = arith.cmpi eq, %arg0, %c0_i32 : i32
    %1 = arith.extui %0 : i1 to i32
    %c0_i32_0 = arith.constant 0 : i32
    %2 = arith.cmpi ne, %1, %c0_i32_0 : i32
    scf.if %2 {
      %c0_71 = arith.constant 0 : index
      %155 = memref.load %arg1[%c0_71] : memref<16xi32, #tpu.memory_space<smem>>
      %156 = arith.index_cast %155 : i32 to index
      %c0_72 = arith.constant 0 : index
      %157 = vector.load %arg3[%156, %c0_72] : memref<128x32xf32, #tpu.memory_space<vmem>>, vector<1x32xf32>
      %c0_73 = arith.constant 0 : index
      %c0_74 = arith.constant 0 : index
      %158 = vector.load %arg25[%c0_73, %c0_74] : memref<16x32xf32, #tpu.memory_space<vmem>>, vector<1x32xf32>
      tpu.vector_store %arg25[%c0_73, %c0_74], %157 {strides = array<i32>} : memref<16x32xf32, #tpu.memory_space<vmem>>, vector<1x32xf32>,
      %c1 = arith.constant 1 : index
      %159 = memref.load %arg1[%c1] : memref<16xi32, #tpu.memory_space<smem>>
      %160 = arith.index_cast %159 : i32 to index
      %c0_75 = arith.constant 0 : index
      %161 = vector.load %arg3[%160, %c0_75] : memref<128x32xf32, #tpu.memory_space<vmem>>, vector<1x32xf32>
      %c1_76 = arith.constant 1 : index
      %c0_77 = arith.constant 0 : index
      %162 = vector.load %arg25[%c1_76, %c0_77] : memref<16x32xf32, #tpu.memory_space<vmem>>, vector<1x32xf32>
      tpu.vector_store %arg25[%c1_76, %c0_77], %161 {strides = array<i32>} : memref<16x32xf32, #tpu.memory_space<vmem>>, vector<1x32xf32>,
      %c2 = arith.constant 2 : index
      %163 = memref.load %arg1[%c2] : memref<16xi32, #tpu.memory_space<smem>>
      %164 = arith.index_cast %163 : i32 to index
      %c0_78 = arith.constant 0 : index
      %165 = vector.load %arg3[%164, %c0_78] : memref<128x32xf32, #tpu.memory_space<vmem>>, vector<1x32xf32>
      %c2_79 = arith.constant 2 : index
      %c0_80 = arith.constant 0 : index
      %166 = vector.load %arg25[%c2_79, %c0_80] : memref<16x32xf32, #tpu.memory_space<vmem>>, vector<1x32xf32>
      tpu.vector_store %arg25[%c2_79, %c0_80], %165 {strides = array<i32>} : memref<16x32xf32, #tpu.memory_space<vmem>>, vector<1x32xf32>,
      %c3 = arith.constant 3 : index
      %167 = memref.load %arg1[%c3] : memref<16xi32, #tpu.memory_space<smem>>
      %168 = arith.index_cast %167 : i32 to index
      %c0_81 = arith.constant 0 : index
      %169 = vector.load %arg3[%168, %c0_81] : memref<128x32xf32, #tpu.memory_space<vmem>>, vector<1x32xf32>
      %c3_82 = arith.constant 3 : index
      %c0_83 = arith.constant 0 : index
      %170 = vector.load %arg25[%c3_82, %c0_83] : memref<16x32xf32, #tpu.memory_space<vmem>>, vector<1x32xf32>
      tpu.vector_store %arg25[%c3_82, %c0_83], %169 {strides = array<i32>} : memref<16x32xf32, #tpu.memory_space<vmem>>, vector<1x32xf32>,
      %c4 = arith.constant 4 : index
      %171 = memref.load %arg1[%c4] : memref<16xi32, #tpu.memory_space<smem>>
      %172 = arith.index_cast %171 : i32 to index
      %c0_84 = arith.constant 0 : index
      %173 = vector.load %arg3[%172, %c0_84] : memref<128x32xf32, #tpu.memory_space<vmem>>, vector<1x32xf32>
      %c4_85 = arith.constant 4 : index
      %c0_86 = arith.constant 0 : index
      %174 = vector.load %arg25[%c4_85, %c0_86] : memref<16x32xf32, #tpu.memory_space<vmem>>, vector<1x32xf32>
      tpu.vector_store %arg25[%c4_85, %c0_86], %173 {strides = array<i32>} : memref<16x32xf32, #tpu.memory_space<vmem>>, vector<1x32xf32>,
      %c5 = arith.constant 5 : index
      %175 = memref.load %arg1[%c5] : memref<16xi32, #tpu.memory_space<smem>>
      %176 = arith.index_cast %175 : i32 to index
      %c0_87 = arith.constant 0 : index
      %177 = vector.load %arg3[%176, %c0_87] : memref<128x32xf32, #tpu.memory_space<vmem>>, vector<1x32xf32>
      %c5_88 = arith.constant 5 : index
      %c0_89 = arith.constant 0 : index
      %178 = vector.load %arg25[%c5_88, %c0_89] : memref<16x32xf32, #tpu.memory_space<vmem>>, vector<1x32xf32>
      tpu.vector_store %arg25[%c5_88, %c0_89], %177 {strides = array<i32>} : memref<16x32xf32, #tpu.memory_space<vmem>>, vector<1x32xf32>,
      %c6 = arith.constant 6 : index
      %179 = memref.load %arg1[%c6] : memref<16xi32, #tpu.memory_space<smem>>
      %180 = arith.index_cast %179 : i32 to index
      %c0_90 = arith.constant 0 : index
      %181 = vector.load %arg3[%180, %c0_90] : memref<128x32xf32, #tpu.memory_space<vmem>>, vector<1x32xf32>
      %c6_91 = arith.constant 6 : index
      %c0_92 = arith.constant 0 : index
      %182 = vector.load %arg25[%c6_91, %c0_92] : memref<16x32xf32, #tpu.memory_space<vmem>>, vector<1x32xf32>
      tpu.vector_store %arg25[%c6_91, %c0_92], %181 {strides = array<i32>} : memref<16x32xf32, #tpu.memory_space<vmem>>, vector<1x32xf32>,
      %c7 = arith.constant 7 : index
      %183 = memref.load %arg1[%c7] : memref<16xi32, #tpu.memory_space<smem>>
      %184 = arith.index_cast %183 : i32 to index
      %c0_93 = arith.constant 0 : index
      %185 = vector.load %arg3[%184, %c0_93] : memref<128x32xf32, #tpu.memory_space<vmem>>, vector<1x32xf32>
      %c7_94 = arith.constant 7 : index
      %c0_95 = arith.constant 0 : index
      %186 = vector.load %arg25[%c7_94, %c0_95] : memref<16x32xf32, #tpu.memory_space<vmem>>, vector<1x32xf32>
      tpu.vector_store %arg25[%c7_94, %c0_95], %185 {strides = array<i32>} : memref<16x32xf32, #tpu.memory_space<vmem>>, vector<1x32xf32>,
      %c8 = arith.constant 8 : index
      %187 = memref.load %arg1[%c8] : memref<16xi32, #tpu.memory_space<smem>>
      %188 = arith.index_cast %187 : i32 to index
      %c0_96 = arith.constant 0 : index
      %189 = vector.load %arg3[%188, %c0_96] : memref<128x32xf32, #tpu.memory_space<vmem>>, vector<1x32xf32>
      %c8_97 = arith.constant 8 : index
      %c0_98 = arith.constant 0 : index
      %190 = vector.load %arg25[%c8_97, %c0_98] : memref<16x32xf32, #tpu.memory_space<vmem>>, vector<1x32xf32>
      tpu.vector_store %arg25[%c8_97, %c0_98], %189 {strides = array<i32>} : memref<16x32xf32, #tpu.memory_space<vmem>>, vector<1x32xf32>,
      %c9 = arith.constant 9 : index
      %191 = memref.load %arg1[%c9] : memref<16xi32, #tpu.memory_space<smem>>
      %192 = arith.index_cast %191 : i32 to index
      %c0_99 = arith.constant 0 : index
      %193 = vector.load %arg3[%192, %c0_99] : memref<128x32xf32, #tpu.memory_space<vmem>>, vector<1x32xf32>
      %c9_100 = arith.constant 9 : index
      %c0_101 = arith.constant 0 : index
      %194 = vector.load %arg25[%c9_100, %c0_101] : memref<16x32xf32, #tpu.memory_space<vmem>>, vector<1x32xf32>
      tpu.vector_store %arg25[%c9_100, %c0_101], %193 {strides = array<i32>} : memref<16x32xf32, #tpu.memory_space<vmem>>, vector<1x32xf32>,
      %c10 = arith.constant 10 : index
      %195 = memref.load %arg1[%c10] : memref<16xi32, #tpu.memory_space<smem>>
      %196 = arith.index_cast %195 : i32 to index
      %c0_102 = arith.constant 0 : index
      %197 = vector.load %arg3[%196, %c0_102] : memref<128x32xf32, #tpu.memory_space<vmem>>, vector<1x32xf32>
      %c10_103 = arith.constant 10 : index
      %c0_104 = arith.constant 0 : index
      %198 = vector.load %arg25[%c10_103, %c0_104] : memref<16x32xf32, #tpu.memory_space<vmem>>, vector<1x32xf32>
      tpu.vector_store %arg25[%c10_103, %c0_104], %197 {strides = array<i32>} : memref<16x32xf32, #tpu.memory_space<vmem>>, vector<1x32xf32>,
      %c11 = arith.constant 11 : index
      %199 = memref.load %arg1[%c11] : memref<16xi32, #tpu.memory_space<smem>>
      %200 = arith.index_cast %199 : i32 to index
      %c0_105 = arith.constant 0 : index
      %201 = vector.load %arg3[%200, %c0_105] : memref<128x32xf32, #tpu.memory_space<vmem>>, vector<1x32xf32>
      %c11_106 = arith.constant 11 : index
      %c0_107 = arith.constant 0 : index
      %202 = vector.load %arg25[%c11_106, %c0_107] : memref<16x32xf32, #tpu.memory_space<vmem>>, vector<1x32xf32>
      tpu.vector_store %arg25[%c11_106, %c0_107], %201 {strides = array<i32>} : memref<16x32xf32, #tpu.memory_space<vmem>>, vector<1x32xf32>,
      %c12 = arith.constant 12 : index
      %203 = memref.load %arg1[%c12] : memref<16xi32, #tpu.memory_space<smem>>
      %204 = arith.index_cast %203 : i32 to index
      %c0_108 = arith.constant 0 : index
      %205 = vector.load %arg3[%204, %c0_108] : memref<128x32xf32, #tpu.memory_space<vmem>>, vector<1x32xf32>
      %c12_109 = arith.constant 12 : index
      %c0_110 = arith.constant 0 : index
      %206 = vector.load %arg25[%c12_109, %c0_110] : memref<16x32xf32, #tpu.memory_space<vmem>>, vector<1x32xf32>
      tpu.vector_store %arg25[%c12_109, %c0_110], %205 {strides = array<i32>} : memref<16x32xf32, #tpu.memory_space<vmem>>, vector<1x32xf32>,
      %c13 = arith.constant 13 : index
      %207 = memref.load %arg1[%c13] : memref<16xi32, #tpu.memory_space<smem>>
      %208 = arith.index_cast %207 : i32 to index
      %c0_111 = arith.constant 0 : index
      %209 = vector.load %arg3[%208, %c0_111] : memref<128x32xf32, #tpu.memory_space<vmem>>, vector<1x32xf32>
      %c13_112 = arith.constant 13 : index
      %c0_113 = arith.constant 0 : index
      %210 = vector.load %arg25[%c13_112, %c0_113] : memref<16x32xf32, #tpu.memory_space<vmem>>, vector<1x32xf32>
      tpu.vector_store %arg25[%c13_112, %c0_113], %209 {strides = array<i32>} : memref<16x32xf32, #tpu.memory_space<vmem>>, vector<1x32xf32>,
      %c14 = arith.constant 14 : index
      %211 = memref.load %arg1[%c14] : memref<16xi32, #tpu.memory_space<smem>>
      %212 = arith.index_cast %211 : i32 to index
      %c0_114 = arith.constant 0 : index
      %213 = vector.load %arg3[%212, %c0_114] : memref<128x32xf32, #tpu.memory_space<vmem>>, vector<1x32xf32>
      %c14_115 = arith.constant 14 : index
      %c0_116 = arith.constant 0 : index
      %214 = vector.load %arg25[%c14_115, %c0_116] : memref<16x32xf32, #tpu.memory_space<vmem>>, vector<1x32xf32>
      tpu.vector_store %arg25[%c14_115, %c0_116], %213 {strides = array<i32>} : memref<16x32xf32, #tpu.memory_space<vmem>>, vector<1x32xf32>,
      %c15 = arith.constant 15 : index
      %215 = memref.load %arg1[%c15] : memref<16xi32, #tpu.memory_space<smem>>
      %216 = arith.index_cast %215 : i32 to index
      %c0_117 = arith.constant 0 : index
      %217 = vector.load %arg3[%216, %c0_117] : memref<128x32xf32, #tpu.memory_space<vmem>>, vector<1x32xf32>
      %c15_118 = arith.constant 15 : index
      %c0_119 = arith.constant 0 : index
      %218 = vector.load %arg25[%c15_118, %c0_119] : memref<16x32xf32, #tpu.memory_space<vmem>>, vector<1x32xf32>
      tpu.vector_store %arg25[%c15_118, %c0_119], %217 {strides = array<i32>} : memref<16x32xf32, #tpu.memory_space<vmem>>, vector<1x32xf32>,
      %c0_120 = arith.constant 0 : index
      %c0_121 = arith.constant 0 : index
      %219 = vector.load %arg25[%c0_120, %c0_121] : memref<16x32xf32, #tpu.memory_space<vmem>>, vector<16x32xf32>
      %c0_122 = arith.constant 0 : index
      %c0_123 = arith.constant 0 : index
      %220 = vector.load %arg4[%c0_122, %c0_123] : memref<16x32xf32, #tpu.memory_space<vmem>>, vector<16x32xf32>
      %221 = arith.addf %219, %220 : vector<16x32xf32>
      %c0_124 = arith.constant 0 : index
      %c0_125 = arith.constant 0 : index
      %222 = vector.load %arg5[%c0_124, %c0_125] : memref<1x32xf32, #tpu.memory_space<vmem>>, vector<1x32xf32>
      %223 = vector.broadcast %222 : vector<1x32xf32> to vector<16x32xf32>
      %224 = arith.addf %221, %223 : vector<16x32xf32>
      %c0_126 = arith.constant 0 : index
      %c0_127 = arith.constant 0 : index
      %225 = vector.load %arg6[%c0_126, %c0_127] : memref<1x32xf32, #tpu.memory_space<vmem>>, vector<1x32xf32>
      %c0_128 = arith.constant 0 : index
      %c0_129 = arith.constant 0 : index
      %226 = vector.load %arg7[%c0_128, %c0_129] : memref<1x32xf32, #tpu.memory_space<vmem>>, vector<1x32xf32>
      %cst_130 = arith.constant dense<0.000000e+00> : vector<16xf32>
      %227 = vector.multi_reduction <add>, %224, %cst_130 [1] : vector<16x32xf32> to vector<16xf32>
      %228 = vector.shape_cast %227 : vector<16xf32> to vector<16x1xf32>
      %cst_131 = arith.constant 3.200000e+01 : f32
      %229 = vector.broadcast %cst_131 : f32 to vector<16x1xf32>
      %230 = arith.divf %228, %229 : vector<16x1xf32>
      %231 = vector.broadcast %230 : vector<16x1xf32> to vector<16x32xf32>
      %232 = arith.subf %224, %231 : vector<16x32xf32>
      %233 = arith.mulf %232, %232 : vector<16x32xf32>
      %cst_132 = arith.constant dense<0.000000e+00> : vector<16xf32>
      %234 = vector.multi_reduction <add>, %233, %cst_132 [1] : vector<16x32xf32> to vector<16xf32>
      %235 = vector.shape_cast %234 : vector<16xf32> to vector<16x1xf32>
      %cst_133 = arith.constant 3.200000e+01 : f32
      %236 = vector.broadcast %cst_133 : f32 to vector<16x1xf32>
      %237 = arith.divf %235, %236 : vector<16x1xf32>
      %238 = vector.broadcast %230 : vector<16x1xf32> to vector<16x32xf32>
      %239 = arith.subf %224, %238 : vector<16x32xf32>
      %cst_134 = arith.constant 9.99999996E-13 : f32
      %240 = vector.broadcast %cst_134 : f32 to vector<16x1xf32>
      %241 = arith.addf %237, %240 : vector<16x1xf32>
      %242 = math.rsqrt %241 : vector<16x1xf32>
      %243 = vector.broadcast %242 : vector<16x1xf32> to vector<16x32xf32>
      %244 = arith.mulf %239, %243 : vector<16x32xf32>
      %245 = vector.broadcast %225 : vector<1x32xf32> to vector<16x32xf32>
      %246 = arith.mulf %244, %245 : vector<16x32xf32>
      %247 = vector.broadcast %226 : vector<1x32xf32> to vector<16x32xf32>
      %248 = arith.addf %246, %247 : vector<16x32xf32>
      %c0_135 = arith.constant 0 : index
      %c0_136 = arith.constant 0 : index
      %249 = vector.load %arg25[%c0_135, %c0_136] : memref<16x32xf32, #tpu.memory_space<vmem>>, vector<16x32xf32>
      tpu.vector_store %arg25[%c0_135, %c0_136], %248 {strides = array<i32>} : memref<16x32xf32, #tpu.memory_space<vmem>>, vector<16x32xf32>,
    } else {
    }
    %c0 = arith.constant 0 : index
    %c0_1 = arith.constant 0 : index
    %3 = vector.load %arg25[%c0, %c0_1] : memref<16x32xf32, #tpu.memory_space<vmem>>, vector<16x32xf32>
    %4 = arith.truncf %3 : vector<16x32xf32> to vector<16x32xbf16>
    %c0_2 = arith.constant 0 : index
    %c0_3 = arith.constant 0 : index
    %c0_4 = arith.constant 0 : index
    %5 = vector.load %arg8[%c0_2, %c0_3, %c0_4] : memref<1x32x96xbf16, #tpu.memory_space<vmem>>, vector<1x32x96xbf16>
    %6 = vector.shape_cast %5 : vector<1x32x96xbf16> to vector<32x96xbf16>
    %cst = arith.constant dense<0.000000e+00> : vector<16x96xf32>
    %7 = tpu.matmul %4, %6, %cst {dimension_numbers = #tpu.dot_dimension_numbers<[1], [0], [0], [1], [0, 0, 1, 1], [], []>} : vector<16x32xbf16>, vector<32x96xbf16>, vector<16x96xf32> -> vector<16x96xf32>
    %c0_5 = arith.constant 0 : index
    %c0_6 = arith.constant 0 : index
    %c0_7 = arith.constant 0 : index
    %8 = vector.load %arg9[%c0_5, %c0_6, %c0_7] : memref<1x1x96xf32, #tpu.memory_space<vmem>>, vector<1x1x96xf32>
    %9 = vector.shape_cast %8 : vector<1x1x96xf32> to vector<1x96xf32>
    %10 = vector.broadcast %9 : vector<1x96xf32> to vector<16x96xf32>
    %11 = arith.addf %7, %10 : vector<16x96xf32>
    %c0_8 = arith.constant 0 : index
    %c0_9 = arith.constant 0 : index
    %12 = vector.load %arg2[%c0_8, %c0_9] : memref<16x16xf32, #tpu.memory_space<vmem>>, vector<16x16xf32>
    %c0_10 = arith.constant 0 : index
    %c0_11 = arith.constant 0 : index
    %c0_12 = arith.constant 0 : index
    %13 = vector.load %arg10[%c0_10, %c0_11, %c0_12] : memref<1x32x32xbf16, #tpu.memory_space<vmem>>, vector<1x32x32xbf16>
    %14 = vector.shape_cast %13 : vector<1x32x32xbf16> to vector<32x32xbf16>
    %15 = vector.extract_strided_slice %11 {offsets = [0, 0], sizes = [16, 16], strides = [1, 1]} : vector<16x96xf32> to vector<16x16xf32>
    %cst_13 = arith.constant 2.500000e-01 : f32
    %16 = vector.broadcast %cst_13 : f32 to vector<16x16xf32>
    %17 = arith.mulf %15, %16 : vector<16x16xf32>
    %18 = arith.truncf %17 : vector<16x16xf32> to vector<16x16xbf16>
    %19 = vector.extract_strided_slice %11 {offsets = [0, 32], sizes = [16, 16], strides = [1, 1]} : vector<16x96xf32> to vector<16x16xf32>
    %20 = arith.truncf %19 : vector<16x16xf32> to vector<16x16xbf16>
    %21 = vector.extract_strided_slice %11 {offsets = [0, 64], sizes = [16, 16], strides = [1, 1]} : vector<16x96xf32> to vector<16x16xf32>
    %22 = arith.truncf %21 : vector<16x16xf32> to vector<16x16xbf16>
    %cst_14 = arith.constant dense<0.000000e+00> : vector<16x16xf32>
    %23 = tpu.matmul %18, %20, %cst_14 {dimension_numbers = #tpu.dot_dimension_numbers<[1], [1], [0], [0], [0, 0, 1, 0], [], []>} : vector<16x16xbf16>, vector<16x16xbf16>, vector<16x16xf32> -> vector<16x16xf32>
    %24 = arith.addf %23, %12 : vector<16x16xf32>
    %cst_15 = arith.constant dense<0xFF800000> : vector<16xf32>
    %25 = vector.multi_reduction <maximumf>, %24, %cst_15 [1] : vector<16x16xf32> to vector<16xf32>
    %26 = vector.shape_cast %25 : vector<16xf32> to vector<16x1xf32>
    %27 = vector.broadcast %26 : vector<16x1xf32> to vector<16x16xf32>
    %28 = arith.subf %24, %27 : vector<16x16xf32>
    %29 = math.exp %28 : vector<16x16xf32>
    %cst_16 = arith.constant dense<0.000000e+00> : vector<16xf32>
    %30 = vector.multi_reduction <add>, %29, %cst_16 [1] : vector<16x16xf32> to vector<16xf32>
    %31 = vector.shape_cast %30 : vector<16xf32> to vector<16x1xf32>
    %32 = vector.broadcast %31 : vector<16x1xf32> to vector<16x16xf32>
    %33 = arith.divf %29, %32 : vector<16x16xf32>
    %34 = arith.truncf %33 : vector<16x16xf32> to vector<16x16xbf16>
    %cst_17 = arith.constant dense<0.000000e+00> : vector<16x16xf32>
    %35 = tpu.matmul %34, %22, %cst_17 {dimension_numbers = #tpu.dot_dimension_numbers<[1], [0], [0], [1], [0, 0, 1, 1], [], []>} : vector<16x16xbf16>, vector<16x16xbf16>, vector<16x16xf32> -> vector<16x16xf32>
    %36 = arith.truncf %35 : vector<16x16xf32> to vector<16x16xbf16>
    %37 = vector.extract_strided_slice %14 {offsets = [0, 0], sizes = [16, 32], strides = [1, 1]} : vector<32x32xbf16> to vector<16x32xbf16>
    %cst_18 = arith.constant dense<0.000000e+00> : vector<16x32xf32>
    %38 = tpu.matmul %36, %37, %cst_18 {dimension_numbers = #tpu.dot_dimension_numbers<[1], [0], [0], [1], [0, 0, 1, 1], [], []>} : vector<16x16xbf16>, vector<16x32xbf16>, vector<16x32xf32> -> vector<16x32xf32>
    %39 = vector.extract_strided_slice %11 {offsets = [0, 16], sizes = [16, 16], strides = [1, 1]} : vector<16x96xf32> to vector<16x16xf32>
    %cst_19 = arith.constant 2.500000e-01 : f32
    %40 = vector.broadcast %cst_19 : f32 to vector<16x16xf32>
    %41 = arith.mulf %39, %40 : vector<16x16xf32>
    %42 = arith.truncf %41 : vector<16x16xf32> to vector<16x16xbf16>
    %43 = vector.extract_strided_slice %11 {offsets = [0, 48], sizes = [16, 16], strides = [1, 1]} : vector<16x96xf32> to vector<16x16xf32>
    %44 = arith.truncf %43 : vector<16x16xf32> to vector<16x16xbf16>
    %45 = vector.extract_strided_slice %11 {offsets = [0, 80], sizes = [16, 16], strides = [1, 1]} : vector<16x96xf32> to vector<16x16xf32>
    %46 = arith.truncf %45 : vector<16x16xf32> to vector<16x16xbf16>
    %cst_20 = arith.constant dense<0.000000e+00> : vector<16x16xf32>
    %47 = tpu.matmul %42, %44, %cst_20 {dimension_numbers = #tpu.dot_dimension_numbers<[1], [1], [0], [0], [0, 0, 1, 0], [], []>} : vector<16x16xbf16>, vector<16x16xbf16>, vector<16x16xf32> -> vector<16x16xf32>
    %48 = arith.addf %47, %12 : vector<16x16xf32>
    %cst_21 = arith.constant dense<0xFF800000> : vector<16xf32>
    %49 = vector.multi_reduction <maximumf>, %48, %cst_21 [1] : vector<16x16xf32> to vector<16xf32>
    %50 = vector.shape_cast %49 : vector<16xf32> to vector<16x1xf32>
    %51 = vector.broadcast %50 : vector<16x1xf32> to vector<16x16xf32>
    %52 = arith.subf %48, %51 : vector<16x16xf32>
    %53 = math.exp %52 : vector<16x16xf32>
    %cst_22 = arith.constant dense<0.000000e+00> : vector<16xf32>
    %54 = vector.multi_reduction <add>, %53, %cst_22 [1] : vector<16x16xf32> to vector<16xf32>
    %55 = vector.shape_cast %54 : vector<16xf32> to vector<16x1xf32>
    %56 = vector.broadcast %55 : vector<16x1xf32> to vector<16x16xf32>
    %57 = arith.divf %53, %56 : vector<16x16xf32>
    %58 = arith.truncf %57 : vector<16x16xf32> to vector<16x16xbf16>
    %cst_23 = arith.constant dense<0.000000e+00> : vector<16x16xf32>
    %59 = tpu.matmul %58, %46, %cst_23 {dimension_numbers = #tpu.dot_dimension_numbers<[1], [0], [0], [1], [0, 0, 1, 1], [], []>} : vector<16x16xbf16>, vector<16x16xbf16>, vector<16x16xf32> -> vector<16x16xf32>
    %60 = arith.truncf %59 : vector<16x16xf32> to vector<16x16xbf16>
    %61 = vector.extract_strided_slice %14 {offsets = [16, 0], sizes = [16, 32], strides = [1, 1]} : vector<32x32xbf16> to vector<16x32xbf16>
    %cst_24 = arith.constant dense<0.000000e+00> : vector<16x32xf32>
    %62 = tpu.matmul %60, %61, %cst_24 {dimension_numbers = #tpu.dot_dimension_numbers<[1], [0], [0], [1], [0, 0, 1, 1], [], []>} : vector<16x16xbf16>, vector<16x32xbf16>, vector<16x32xf32> -> vector<16x32xf32>
    %63 = arith.addf %38, %62 : vector<16x32xf32>
    %c0_25 = arith.constant 0 : index
    %c0_26 = arith.constant 0 : index
    %c0_27 = arith.constant 0 : index
    %64 = vector.load %arg11[%c0_25, %c0_26, %c0_27] : memref<1x1x32xf32, #tpu.memory_space<vmem>>, vector<1x1x32xf32>
    %65 = vector.shape_cast %64 : vector<1x1x32xf32> to vector<1x32xf32>
    %66 = vector.broadcast %65 : vector<1x32xf32> to vector<16x32xf32>
    %67 = arith.addf %63, %66 : vector<16x32xf32>
    %68 = arith.addf %67, %3 : vector<16x32xf32>
    %c0_28 = arith.constant 0 : index
    %c0_29 = arith.constant 0 : index
    %c0_30 = arith.constant 0 : index
    %69 = vector.load %arg12[%c0_28, %c0_29, %c0_30] : memref<1x1x32xf32, #tpu.memory_space<vmem>>, vector<1x1x32xf32>
    %70 = vector.shape_cast %69 : vector<1x1x32xf32> to vector<1x32xf32>
    %c0_31 = arith.constant 0 : index
    %c0_32 = arith.constant 0 : index
    %c0_33 = arith.constant 0 : index
    %71 = vector.load %arg13[%c0_31, %c0_32, %c0_33] : memref<1x1x32xf32, #tpu.memory_space<vmem>>, vector<1x1x32xf32>
    %72 = vector.shape_cast %71 : vector<1x1x32xf32> to vector<1x32xf32>
    %cst_34 = arith.constant dense<0.000000e+00> : vector<16xf32>
    %73 = vector.multi_reduction <add>, %68, %cst_34 [1] : vector<16x32xf32> to vector<16xf32>
    %74 = vector.shape_cast %73 : vector<16xf32> to vector<16x1xf32>
    %cst_35 = arith.constant 3.200000e+01 : f32
    %75 = vector.broadcast %cst_35 : f32 to vector<16x1xf32>
    %76 = arith.divf %74, %75 : vector<16x1xf32>
    %77 = vector.broadcast %76 : vector<16x1xf32> to vector<16x32xf32>
    %78 = arith.subf %68, %77 : vector<16x32xf32>
    %79 = arith.mulf %78, %78 : vector<16x32xf32>
    %cst_36 = arith.constant dense<0.000000e+00> : vector<16xf32>
    %80 = vector.multi_reduction <add>, %79, %cst_36 [1] : vector<16x32xf32> to vector<16xf32>
    %81 = vector.shape_cast %80 : vector<16xf32> to vector<16x1xf32>
    %cst_37 = arith.constant 3.200000e+01 : f32
    %82 = vector.broadcast %cst_37 : f32 to vector<16x1xf32>
    %83 = arith.divf %81, %82 : vector<16x1xf32>
    %84 = vector.broadcast %76 : vector<16x1xf32> to vector<16x32xf32>
    %85 = arith.subf %68, %84 : vector<16x32xf32>
    %cst_38 = arith.constant 9.99999996E-13 : f32
    %86 = vector.broadcast %cst_38 : f32 to vector<16x1xf32>
    %87 = arith.addf %83, %86 : vector<16x1xf32>
    %88 = math.rsqrt %87 : vector<16x1xf32>
    %89 = vector.broadcast %88 : vector<16x1xf32> to vector<16x32xf32>
    %90 = arith.mulf %85, %89 : vector<16x32xf32>
    %91 = vector.broadcast %70 : vector<1x32xf32> to vector<16x32xf32>
    %92 = arith.mulf %90, %91 : vector<16x32xf32>
    %93 = vector.broadcast %72 : vector<1x32xf32> to vector<16x32xf32>
    %94 = arith.addf %92, %93 : vector<16x32xf32>
    %95 = arith.truncf %94 : vector<16x32xf32> to vector<16x32xbf16>
    %c0_39 = arith.constant 0 : index
    %c0_40 = arith.constant 0 : index
    %c0_41 = arith.constant 0 : index
    %96 = vector.load %arg14[%c0_39, %c0_40, %c0_41] : memref<1x32x64xbf16, #tpu.memory_space<vmem>>, vector<1x32x64xbf16>
    %97 = vector.shape_cast %96 : vector<1x32x64xbf16> to vector<32x64xbf16>
    %cst_42 = arith.constant dense<0.000000e+00> : vector<16x64xf32>
    %98 = tpu.matmul %95, %97, %cst_42 {dimension_numbers = #tpu.dot_dimension_numbers<[1], [0], [0], [1], [0, 0, 1, 1], [], []>} : vector<16x32xbf16>, vector<32x64xbf16>, vector<16x64xf32> -> vector<16x64xf32>
    %c0_43 = arith.constant 0 : index
    %c0_44 = arith.constant 0 : index
    %c0_45 = arith.constant 0 : index
    %99 = vector.load %arg15[%c0_43, %c0_44, %c0_45] : memref<1x1x64xf32, #tpu.memory_space<vmem>>, vector<1x1x64xf32>
    %100 = vector.shape_cast %99 : vector<1x1x64xf32> to vector<1x64xf32>
    %101 = vector.broadcast %100 : vector<1x64xf32> to vector<16x64xf32>
    %102 = arith.addf %98, %101 : vector<16x64xf32>
    %103 = arith.mulf %102, %102 : vector<16x64xf32>
    %104 = arith.mulf %102, %103 : vector<16x64xf32>
    %cst_46 = arith.constant 4.471500e-02 : f32
    %105 = vector.broadcast %cst_46 : f32 to vector<16x64xf32>
    %106 = arith.mulf %105, %104 : vector<16x64xf32>
    %107 = arith.addf %102, %106 : vector<16x64xf32>
    %cst_47 = arith.constant 0.797884583 : f32
    %108 = vector.broadcast %cst_47 : f32 to vector<16x64xf32>
    %109 = arith.mulf %108, %107 : vector<16x64xf32>
    %110 = math.tanh %109 : vector<16x64xf32>
    %cst_48 = arith.constant 1.000000e+00 : f32
    %111 = vector.broadcast %cst_48 : f32 to vector<16x64xf32>
    %112 = arith.addf %111, %110 : vector<16x64xf32>
    %cst_49 = arith.constant 5.000000e-01 : f32
    %113 = vector.broadcast %cst_49 : f32 to vector<16x64xf32>
    %114 = arith.mulf %113, %112 : vector<16x64xf32>
    %115 = arith.mulf %102, %114 : vector<16x64xf32>
    %116 = arith.truncf %115 : vector<16x64xf32> to vector<16x64xbf16>
    %c0_50 = arith.constant 0 : index
    %c0_51 = arith.constant 0 : index
    %c0_52 = arith.constant 0 : index
    %117 = vector.load %arg16[%c0_50, %c0_51, %c0_52] : memref<1x64x32xbf16, #tpu.memory_space<vmem>>, vector<1x64x32xbf16>
    %118 = vector.shape_cast %117 : vector<1x64x32xbf16> to vector<64x32xbf16>
    %cst_53 = arith.constant dense<0.000000e+00> : vector<16x32xf32>
    %119 = tpu.matmul %116, %118, %cst_53 {dimension_numbers = #tpu.dot_dimension_numbers<[1], [0], [0], [1], [0, 0, 1, 1], [], []>} : vector<16x64xbf16>, vector<64x32xbf16>, vector<16x32xf32> -> vector<16x32xf32>
    %c0_54 = arith.constant 0 : index
    %c0_55 = arith.constant 0 : index
    %c0_56 = arith.constant 0 : index
    %120 = vector.load %arg17[%c0_54, %c0_55, %c0_56] : memref<1x1x32xf32, #tpu.memory_space<vmem>>, vector<1x1x32xf32>
    %121 = vector.shape_cast %120 : vector<1x1x32xf32> to vector<1x32xf32>
    %122 = vector.broadcast %121 : vector<1x32xf32> to vector<16x32xf32>
    %123 = arith.addf %119, %122 : vector<16x32xf32>
    %124 = arith.addf %123, %94 : vector<16x32xf32>
    %c0_57 = arith.constant 0 : index
    %c0_58 = arith.constant 0 : index
    %c0_59 = arith.constant 0 : index
    %125 = vector.load %arg18[%c0_57, %c0_58, %c0_59] : memref<1x1x32xf32, #tpu.memory_space<vmem>>, vector<1x1x32xf32>
    %126 = vector.shape_cast %125 : vector<1x1x32xf32> to vector<1x32xf32>
    %c0_60 = arith.constant 0 : index
    %c0_61 = arith.constant 0 : index
    %c0_62 = arith.constant 0 : index
    %127 = vector.load %arg19[%c0_60, %c0_61, %c0_62] : memref<1x1x32xf32, #tpu.memory_space<vmem>>, vector<1x1x32xf32>
    %128 = vector.shape_cast %127 : vector<1x1x32xf32> to vector<1x32xf32>
    %cst_63 = arith.constant dense<0.000000e+00> : vector<16xf32>
    %129 = vector.multi_reduction <add>, %124, %cst_63 [1] : vector<16x32xf32> to vector<16xf32>
    %130 = vector.shape_cast %129 : vector<16xf32> to vector<16x1xf32>
    %cst_64 = arith.constant 3.200000e+01 : f32
    %131 = vector.broadcast %cst_64 : f32 to vector<16x1xf32>
    %132 = arith.divf %130, %131 : vector<16x1xf32>
    %133 = vector.broadcast %132 : vector<16x1xf32> to vector<16x32xf32>
    %134 = arith.subf %124, %133 : vector<16x32xf32>
    %135 = arith.mulf %134, %134 : vector<16x32xf32>
    %cst_65 = arith.constant dense<0.000000e+00> : vector<16xf32>
    %136 = vector.multi_reduction <add>, %135, %cst_65 [1] : vector<16x32xf32> to vector<16xf32>
    %137 = vector.shape_cast %136 : vector<16xf32> to vector<16x1xf32>
    %cst_66 = arith.constant 3.200000e+01 : f32
    %138 = vector.broadcast %cst_66 : f32 to vector<16x1xf32>
    %139 = arith.divf %137, %138 : vector<16x1xf32>
    %140 = vector.broadcast %132 : vector<16x1xf32> to vector<16x32xf32>
    %141 = arith.subf %124, %140 : vector<16x32xf32>
    %cst_67 = arith.constant 9.99999996E-13 : f32
    %142 = vector.broadcast %cst_67 : f32 to vector<16x1xf32>
    %143 = arith.addf %139, %142 : vector<16x1xf32>
    %144 = math.rsqrt %143 : vector<16x1xf32>
    %145 = vector.broadcast %144 : vector<16x1xf32> to vector<16x32xf32>
    %146 = arith.mulf %141, %145 : vector<16x32xf32>
    %147 = vector.broadcast %126 : vector<1x32xf32> to vector<16x32xf32>
    %148 = arith.mulf %146, %147 : vector<16x32xf32>
    %149 = vector.broadcast %128 : vector<1x32xf32> to vector<16x32xf32>
    %150 = arith.addf %148, %149 : vector<16x32xf32>
    %c0_68 = arith.constant 0 : index
    %c0_69 = arith.constant 0 : index
    %151 = vector.load %arg25[%c0_68, %c0_69] : memref<16x32xf32, #tpu.memory_space<vmem>>, vector<16x32xf32>
    tpu.vector_store %arg25[%c0_68, %c0_69], %150 {strides = array<i32>} : memref<16x32xf32, #tpu.memory_space<vmem>>, vector<16x32xf32>,
    %c1_i32 = arith.constant 1 : i32
    %152 = arith.cmpi eq, %arg0, %c1_i32 : i32
    %153 = arith.extui %152 : i1 to i32
    %c0_i32_70 = arith.constant 0 : i32
    %154 = arith.cmpi ne, %153, %c0_i32_70 : i32
    scf.if %154 {
      %c0_71 = arith.constant 0 : index
      %c0_72 = arith.constant 0 : index
      %155 = vector.load %arg25[%c0_71, %c0_72] : memref<16x32xf32, #tpu.memory_space<vmem>>, vector<16x32xf32>
      %156 = vector.extract_strided_slice %155 {offsets = [0, 0], sizes = [1, 32], strides = [1, 1]} : vector<16x32xf32> to vector<1x32xf32>
      %157 = vector.extract_strided_slice %155 {offsets = [8, 0], sizes = [1, 32], strides = [1, 1]} : vector<16x32xf32> to vector<1x32xf32>
      %158 = tpu.concatenate %156, %157 in 0 : vector<1x32xf32>, vector<1x32xf32> -> vector<2x32xf32>
      %159 = arith.truncf %158 : vector<2x32xf32> to vector<2x32xbf16>
      %c0_73 = arith.constant 0 : index
      %c0_74 = arith.constant 0 : index
      %160 = vector.load %arg20[%c0_73, %c0_74] : memref<32x32xbf16, #tpu.memory_space<vmem>>, vector<32x32xbf16>
      %cst_75 = arith.constant dense<0.000000e+00> : vector<2x32xf32>
      %161 = tpu.matmul %159, %160, %cst_75 {dimension_numbers = #tpu.dot_dimension_numbers<[1], [0], [0], [1], [0, 0, 1, 1], [], []>} : vector<2x32xbf16>, vector<32x32xbf16>, vector<2x32xf32> -> vector<2x32xf32>
      %c0_76 = arith.constant 0 : index
      %c0_77 = arith.constant 0 : index
      %162 = vector.load %arg21[%c0_76, %c0_77] : memref<1x32xf32, #tpu.memory_space<vmem>>, vector<1x32xf32>
      %163 = vector.broadcast %162 : vector<1x32xf32> to vector<2x32xf32>
      %164 = arith.addf %161, %163 : vector<2x32xf32>
      %165 = math.tanh %164 : vector<2x32xf32>
      %c0_78 = arith.constant 0 : index
      %c0_79 = arith.constant 0 : index
      %166 = vector.load %arg22[%c0_78, %c0_79] : memref<1x32xf32, #tpu.memory_space<vmem>>, vector<1x32xf32>
      %167 = vector.broadcast %166 : vector<1x32xf32> to vector<2x32xf32>
      %168 = arith.mulf %165, %167 : vector<2x32xf32>
      %cst_80 = arith.constant dense<0.000000e+00> : vector<2xf32>
      %169 = vector.multi_reduction <add>, %168, %cst_80 [1] : vector<2x32xf32> to vector<2xf32>
      %170 = vector.shape_cast %169 : vector<2xf32> to vector<2x1xf32>
      %c0_81 = arith.constant 0 : index
      %c0_82 = arith.constant 0 : index
      %171 = vector.load %arg23[%c0_81, %c0_82] : memref<1x1xf32, #tpu.memory_space<vmem>>, vector<1x1xf32>
      %172 = vector.broadcast %171 : vector<1x1xf32> to vector<2x1xf32>
      %173 = arith.addf %170, %172 : vector<2x1xf32>
      %c0_83 = arith.constant 0 : index
      %c0_84 = arith.constant 0 : index
      %174 = vector.load %arg24[%c0_83, %c0_84] : memref<2x1xf32, #tpu.memory_space<vmem>>, vector<2x1xf32>
      tpu.vector_store %arg24[%c0_83, %c0_84], %173 {strides = array<i32>} : memref<2x1xf32, #tpu.memory_space<vmem>>, vector<2x1xf32>,
    } else {
    }
    return
  }
  func.func @transform_0(%arg0: i32, %arg1: memref<16xi32, #tpu.memory_space<smem>>) -> (i32, i32) {
    %c0_i32 = arith.constant 0 : i32
    %c0_i32_0 = arith.constant 0 : i32
    %c0_i32_1 = arith.constant 0 : i32
    return %c0_i32, %c0_i32_0 : i32, i32
  }
  func.func @transform_1(%arg0: i32, %arg1: memref<16xi32, #tpu.memory_space<smem>>) -> (i32, i32) {
    %c0_i32 = arith.constant 0 : i32
    %c0_i32_0 = arith.constant 0 : i32
    %c0_i32_1 = arith.constant 0 : i32
    return %c0_i32, %c0_i32_0 : i32, i32
  }
  func.func @transform_2(%arg0: i32, %arg1: memref<16xi32, #tpu.memory_space<smem>>) -> (i32, i32) {
    %c0_i32 = arith.constant 0 : i32
    %c0_i32_0 = arith.constant 0 : i32
    %c0_i32_1 = arith.constant 0 : i32
    return %c0_i32, %c0_i32_0 : i32, i32
  }
  func.func @transform_3(%arg0: i32, %arg1: memref<16xi32, #tpu.memory_space<smem>>) -> (i32, i32) {
    %c0_i32 = arith.constant 0 : i32
    %c0_i32_0 = arith.constant 0 : i32
    %c0_i32_1 = arith.constant 0 : i32
    return %c0_i32, %c0_i32_0 : i32, i32
  }
  func.func @transform_4(%arg0: i32, %arg1: memref<16xi32, #tpu.memory_space<smem>>) -> (i32, i32) {
    %c0_i32 = arith.constant 0 : i32
    %c0_i32_0 = arith.constant 0 : i32
    %c0_i32_1 = arith.constant 0 : i32
    return %c0_i32, %c0_i32_0 : i32, i32
  }
  func.func @transform_5(%arg0: i32, %arg1: memref<16xi32, #tpu.memory_space<smem>>) -> (i32, i32) {
    %c0_i32 = arith.constant 0 : i32
    %c0_i32_0 = arith.constant 0 : i32
    %c0_i32_1 = arith.constant 0 : i32
    return %c0_i32, %c0_i32_0 : i32, i32
  }
  func.func @transform_6(%arg0: i32, %arg1: memref<16xi32, #tpu.memory_space<smem>>) -> (i32, i32, i32) {
    %c0_i32 = arith.constant 0 : i32
    %c0_i32_0 = arith.constant 0 : i32
    %c0_i32_1 = arith.constant 0 : i32
    return %arg0, %c0_i32, %c0_i32_0 : i32, i32, i32
  }
  func.func @transform_7(%arg0: i32, %arg1: memref<16xi32, #tpu.memory_space<smem>>) -> (i32, i32, i32) {
    %c0_i32 = arith.constant 0 : i32
    %c0_i32_0 = arith.constant 0 : i32
    %c0_i32_1 = arith.constant 0 : i32
    return %arg0, %c0_i32, %c0_i32_0 : i32, i32, i32
  }
  func.func @transform_8(%arg0: i32, %arg1: memref<16xi32, #tpu.memory_space<smem>>) -> (i32, i32, i32) {
    %c0_i32 = arith.constant 0 : i32
    %c0_i32_0 = arith.constant 0 : i32
    %c0_i32_1 = arith.constant 0 : i32
    return %arg0, %c0_i32, %c0_i32_0 : i32, i32, i32
  }
  func.func @transform_9(%arg0: i32, %arg1: memref<16xi32, #tpu.memory_space<smem>>) -> (i32, i32, i32) {
    %c0_i32 = arith.constant 0 : i32
    %c0_i32_0 = arith.constant 0 : i32
    %c0_i32_1 = arith.constant 0 : i32
    return %arg0, %c0_i32, %c0_i32_0 : i32, i32, i32
  }
  func.func @transform_10(%arg0: i32, %arg1: memref<16xi32, #tpu.memory_space<smem>>) -> (i32, i32, i32) {
    %c0_i32 = arith.constant 0 : i32
    %c0_i32_0 = arith.constant 0 : i32
    %c0_i32_1 = arith.constant 0 : i32
    return %arg0, %c0_i32, %c0_i32_0 : i32, i32, i32
  }
  func.func @transform_11(%arg0: i32, %arg1: memref<16xi32, #tpu.memory_space<smem>>) -> (i32, i32, i32) {
    %c0_i32 = arith.constant 0 : i32
    %c0_i32_0 = arith.constant 0 : i32
    %c0_i32_1 = arith.constant 0 : i32
    return %arg0, %c0_i32, %c0_i32_0 : i32, i32, i32
  }
  func.func @transform_12(%arg0: i32, %arg1: memref<16xi32, #tpu.memory_space<smem>>) -> (i32, i32, i32) {
    %c0_i32 = arith.constant 0 : i32
    %c0_i32_0 = arith.constant 0 : i32
    %c0_i32_1 = arith.constant 0 : i32
    return %arg0, %c0_i32, %c0_i32_0 : i32, i32, i32
  }
  func.func @transform_13(%arg0: i32, %arg1: memref<16xi32, #tpu.memory_space<smem>>) -> (i32, i32, i32) {
    %c0_i32 = arith.constant 0 : i32
    %c0_i32_0 = arith.constant 0 : i32
    %c0_i32_1 = arith.constant 0 : i32
    return %arg0, %c0_i32, %c0_i32_0 : i32, i32, i32
  }
  func.func @transform_14(%arg0: i32, %arg1: memref<16xi32, #tpu.memory_space<smem>>) -> (i32, i32, i32) {
    %c0_i32 = arith.constant 0 : i32
    %c0_i32_0 = arith.constant 0 : i32
    %c0_i32_1 = arith.constant 0 : i32
    return %arg0, %c0_i32, %c0_i32_0 : i32, i32, i32
  }
  func.func @transform_15(%arg0: i32, %arg1: memref<16xi32, #tpu.memory_space<smem>>) -> (i32, i32, i32) {
    %c0_i32 = arith.constant 0 : i32
    %c0_i32_0 = arith.constant 0 : i32
    %c0_i32_1 = arith.constant 0 : i32
    return %arg0, %c0_i32, %c0_i32_0 : i32, i32, i32
  }
  func.func @transform_16(%arg0: i32, %arg1: memref<16xi32, #tpu.memory_space<smem>>) -> (i32, i32, i32) {
    %c0_i32 = arith.constant 0 : i32
    %c0_i32_0 = arith.constant 0 : i32
    %c0_i32_1 = arith.constant 0 : i32
    return %arg0, %c0_i32, %c0_i32_0 : i32, i32, i32
  }
  func.func @transform_17(%arg0: i32, %arg1: memref<16xi32, #tpu.memory_space<smem>>) -> (i32, i32, i32) {
    %c0_i32 = arith.constant 0 : i32
    %c0_i32_0 = arith.constant 0 : i32
    %c0_i32_1 = arith.constant 0 : i32
    return %arg0, %c0_i32, %c0_i32_0 : i32, i32, i32
  }
  func.func @transform_18(%arg0: i32, %arg1: memref<16xi32, #tpu.memory_space<smem>>) -> (i32, i32) {
    %c0_i32 = arith.constant 0 : i32
    %c0_i32_0 = arith.constant 0 : i32
    %c0_i32_1 = arith.constant 0 : i32
    return %c0_i32, %c0_i32_0 : i32, i32
  }
  func.func @transform_19(%arg0: i32, %arg1: memref<16xi32, #tpu.memory_space<smem>>) -> (i32, i32) {
    %c0_i32 = arith.constant 0 : i32
    %c0_i32_0 = arith.constant 0 : i32
    %c0_i32_1 = arith.constant 0 : i32
    return %c0_i32, %c0_i32_0 : i32, i32
  }
  func.func @transform_20(%arg0: i32, %arg1: memref<16xi32, #tpu.memory_space<smem>>) -> (i32, i32) {
    %c0_i32 = arith.constant 0 : i32
    %c0_i32_0 = arith.constant 0 : i32
    %c0_i32_1 = arith.constant 0 : i32
    return %c0_i32, %c0_i32_0 : i32, i32
  }
  func.func @transform_21(%arg0: i32, %arg1: memref<16xi32, #tpu.memory_space<smem>>) -> (i32, i32) {
    %c0_i32 = arith.constant 0 : i32
    %c0_i32_0 = arith.constant 0 : i32
    %c0_i32_1 = arith.constant 0 : i32
    return %c0_i32, %c0_i32_0 : i32, i32
  }
  func.func @transform_22(%arg0: i32, %arg1: memref<16xi32, #tpu.memory_space<smem>>) -> (i32, i32) {
    %c0_i32 = arith.constant 0 : i32
    %c0_i32_0 = arith.constant 0 : i32
    %c0_i32_1 = arith.constant 0 : i32
    return %c0_i32, %c0_i32_0 : i32, i32
  }
}

</mosaic_0001>

<llo_original>
// kernel: mul.8
$region0: #{mul.8}
  %s0 = inlined_call_operand.vmem [shape: f32[2,8], index: 0, kind: input, shape index: {}]
  %s1 = inlined_call_operand.vmem [shape: f32[16], index: 1, kind: output, shape index: {}]
  $region1: #{mul.8} parent=0
    #allocation0 [shape = 'u8[4096]{0}', space=vmem, size = 0x1000, scoped, tag = 'scoped mem for output reshape']
    #allocation1 [shape = 'u8[4096]{0}', space=vmem, size = 0x1000, scoped, tag = 'scoped mem for input reshape']
    %s3 = sshll.u32 1, 2
    %s4 = ssub.s32 %s3, 1
    %v5 = vld [vmem:[%s0] sm:%s4]
    %6 = vst [vmem:[#allocation1] sm:%s4] %v5
    %v7 = vld [vmem:[#allocation1] sm:$0x1]
    %vm8 = vcmask 64512
    %9 = vst.msk [vmem:[#allocation0] sm:$0x1] %vm8, %v7
    %s10 = scalar_lea.vmem [#allocation1], 1
    %v11 = vld [vmem:[%s10] sm:$0x1]
    %12 = vrot.lane.b32.xlu0 %v11, 8
    %v13 = vpop.permute.xlu0 %12
    %vm14 = vcmask 130112
    %15 = vst.msk [vmem:[#allocation0] sm:$0x1] %vm14, %v13
    %s17 = sshll.u32 1, 1
    %s18 = ssub.s32 %s17, 1
    %v20 = vld [vmem:[#allocation0] sm:%s18]
    %s21 = sshll.u32 1, 1
    %s22 = ssub.s32 %s21, 1
    %23 = vst [vmem:[%s1] sm:%s22] %v20

// kernel: survey_classifier_forward.1
$region0: #{survey_classifier_forward.1}
  #allocation0 [shape = 'u32[]', space=smem, size = 0x4, offset = 0x4, fixed_abs, tag = 'smem constant byte address 0x4 - core index']
  #allocation1 [shape = 'u32[144,128]{1,0:T(1,128)}', space=vmem, size = 0x12000, scoped, tag = 'internal scratch']
  #allocation2 [shape = 'f32[16,32]{1,0:T(8,128)}', space=vmem, size = 0x2000, scoped, tag = 'scratch operand']
  #allocation3 [shape = 's32[1]{0}', space=sflag, size = 0x4, scoped, tag = 'scoped memory for survey_classifier_forward.1']
  #allocation4 [shape = 'u8[512]{0}', space=smem, size = 0x200, scoped, tag = 'prefetched SMEM operand 0']
  #allocation5 [shape = 'f32[1,1]{1,0:T(1,128)S(1)}', space=vmem, size = 0x200, scoped, tag = 'scoped memory for survey_classifier_forward.1']
  %s0 = inlined_call_operand.vmem [shape: s32[16], index: 0, kind: input, shape index: {}]
  %s1 = inlined_call_operand.vmem [shape: f32[16,16], index: 1, kind: input, shape index: {}]
  %s2 = inlined_call_operand.vmem [shape: f32[128,32], index: 2, kind: input, shape index: {}]
  %s3 = inlined_call_operand.vmem [shape: f32[16,32], index: 3, kind: input, shape index: {}]
  %s4 = inlined_call_operand.vmem [shape: f32[1,32], index: 4, kind: input, shape index: {}]
  %s5 = inlined_call_operand.vmem [shape: f32[1,32], index: 5, kind: input, shape index: {}]
  %s6 = inlined_call_operand.vmem [shape: f32[1,32], index: 6, kind: input, shape index: {}]
  %s7 = inlined_call_operand.vmem [shape: bf16[2,32,96], index: 7, kind: input, shape index: {}]
  %s8 = inlined_call_operand.vmem [shape: f32[2,1,96], index: 8, kind: input, shape index: {}]
  %s9 = inlined_call_operand.vmem [shape: bf16[2,32,32], index: 9, kind: input, shape index: {}]
  %s10 = inlined_call_operand.vmem [shape: f32[2,1,32], index: 10, kind: input, shape index: {}]
  %s11 = inlined_call_operand.vmem [shape: f32[2,1,32], index: 11, kind: input, shape index: {}]
  %s12 = inlined_call_operand.vmem [shape: f32[2,1,32], index: 12, kind: input, shape index: {}]
  %s13 = inlined_call_operand.vmem [shape: bf16[2,32,64], index: 13, kind: input, shape index: {}]
  %s14 = inlined_call_operand.vmem [shape: f32[2,1,64], index: 14, kind: input, shape index: {}]
  %s15 = inlined_call_operand.vmem [shape: bf16[2,64,32], index: 15, kind: input, shape index: {}]
  %s16 = inlined_call_operand.vmem [shape: f32[2,1,32], index: 16, kind: input, shape index: {}]
  %s17 = inlined_call_operand.vmem [shape: f32[2,1,32], index: 17, kind: input, shape index: {}]
  %s18 = inlined_call_operand.vmem [shape: f32[2,1,32], index: 18, kind: input, shape index: {}]
  %s19 = inlined_call_operand.vmem [shape: bf16[32,32], index: 19, kind: input, shape index: {}]
  %s20 = inlined_call_operand.vmem [shape: f32[1,32], index: 20, kind: input, shape index: {}]
  %s21 = inlined_call_operand.vmem [shape: f32[1,32], index: 21, kind: input, shape index: {}]
  %s22 = inlined_call_operand.<no memory space> [shape: f32[1,1], index: 22, kind: input, shape index: {}]
  %s23 = inlined_call_operand.vmem [shape: f32[2,1], index: 23, kind: output, shape index: {}]
  %s24 = sld [smem:[#allocation0]]
  $region129: #{survey_classifier_forward.1} parent=0
    _
  %s26 = ssub.s32 1, %s24
  %s27 = scalar_select 0, %s26, %s24
  %s28 = sshll.u32 %s0, 4
  %s29 = int_to_ptr.vmem [resolvable:$true] %s28
  %31 = dma.vmem_to_smem %s29, 16, [#allocation4], [#allocation3]
  %v32 = vstv %s22
  %33 = vst [vmem:[#allocation5] sm:$0x1] %v32
  %34 = dma.done [#allocation3], 16
  %35 = sfence
  loop: start=0, step=1, limit=4
  $region2: #{survey_classifier_forward.1} parent=0 // loop_pre_header
    _
  $region3: #{survey_classifier_forward.1} parent=0 // loop_header
    %s37 = sphi 0, %s41
    %p38 = scmp.ge.s32.totalorder %s37, 4
    %s45 = sphi 0, %s45
    %s47 = sphi 0, %s45
    %s48 = sphi 0, %s47
    %s62 = sphi 0, %s48
    %s66 = sphi 0, %s66
    %s68 = sphi 0, %s66
    %s69 = sphi 0, %s68
    %s83 = sphi 0, %s69
    %s87 = sphi 0, %s87
    %s89 = sphi 0, %s87
    %s90 = sphi 0, %s89
    %s104 = sphi 0, %s90
    %s108 = sphi 0, %s108
    %s110 = sphi 0, %s108
    %s111 = sphi 0, %s110
    %s125 = sphi 0, %s111
    %s129 = sphi 0, %s129
    %s131 = sphi 0, %s129
    %s132 = sphi 0, %s131
    %s146 = sphi 0, %s132
    %s150 = sphi 0, %s150
    %s152 = sphi 0, %s150
    %s153 = sphi 0, %s152
    %s167 = sphi 0, %s153
    %s173 = sphi 0, %s175
    %s176 = sphi 0, %s173
    %s177 = sphi 0, %s176
    %s193 = sphi 0, %s177
    %s199 = sphi 0, %s201
    %s202 = sphi 0, %s199
    %s203 = sphi 0, %s202
    %s219 = sphi 0, %s203
    %s225 = sphi 0, %s227
    %s228 = sphi 0, %s225
    %s229 = sphi 0, %s228
    %s245 = sphi 0, %s229
    %s251 = sphi 0, %s253
    %s254 = sphi 0, %s251
    %s255 = sphi 0, %s254
    %s271 = sphi 0, %s255
    %s277 = sphi 0, %s279
    %s280 = sphi 0, %s277
    %s281 = sphi 0, %s280
    %s297 = sphi 0, %s281
    %s303 = sphi 0, %s305
    %s306 = sphi 0, %s303
    %s307 = sphi 0, %s306
    %s323 = sphi 0, %s307
    %s329 = sphi 0, %s331
    %s332 = sphi 0, %s329
    %s333 = sphi 0, %s332
    %s349 = sphi 0, %s333
    %s355 = sphi 0, %s357
    %s358 = sphi 0, %s355
    %s359 = sphi 0, %s358
    %s375 = sphi 0, %s359
    %s381 = sphi 0, %s383
    %s384 = sphi 0, %s381
    %s385 = sphi 0, %s384
    %s401 = sphi 0, %s385
    %s407 = sphi 0, %s409
    %s410 = sphi 0, %s407
    %s411 = sphi 0, %s410
    %s427 = sphi 0, %s411
    %s433 = sphi 0, %s435
    %s436 = sphi 0, %s433
    %s437 = sphi 0, %s436
    %s453 = sphi 0, %s437
    %s459 = sphi 0, %s461
    %s462 = sphi 0, %s459
    %s463 = sphi 0, %s462
    %s479 = sphi 0, %s463
    %s483 = sphi 0, %s483
    %s485 = sphi 0, %s483
    %s486 = sphi 0, %s485
    %s500 = sphi 0, %s486
    %s504 = sphi 0, %s504
    %s506 = sphi 0, %s504
    %s507 = sphi 0, %s506
    %s521 = sphi 0, %s507
    %s525 = sphi 0, %s525
    %s527 = sphi 0, %s525
    %s528 = sphi 0, %s527
    %s542 = sphi 0, %s528
    %s546 = sphi 0, %s546
    %s548 = sphi 0, %s546
    %s549 = sphi 0, %s548
    %s563 = sphi 0, %s549
    %s567 = sphi 0, %s567
    %s569 = sphi 0, %s567
    %s570 = sphi 0, %s569
    %s584 = sphi 0, %s570
  $region4: #{survey_classifier_forward.1} parent=0 // loop_header_branch
    %40 = sbr.rel (%p38) target = $region8
  $region5: #{survey_classifier_forward.1} parent=0 // loop_body
    %s42 = ssub.s32 %s37, 1
    %s43 = ssub.s32 %s37, 2
    %s44 = sadd.s32 %s37, 1
    %s46 = sadd.s32 %s45, 1
    %p49 = scmp.eq.s32.totalorder %s37, 1
    %p50 = scmp.ne.s32.totalorder %s45, %s47
    %p51 = scmp.eq.s32.totalorder %s37, 0
    %p52 = por %p50, %p51
    %p53 = scmp.ne.s32.totalorder %s45, %s47
    %p54 = scmp.eq.s32.totalorder %s42, 1
    %p55 = por %p53, %p54
    %p56 = scmp.ne.s32.totalorder %s47, %s48
    %p57 = scmp.eq.s32.totalorder %s42, 0
    %p58 = por %p56, %p57
    %p59 = scmp.ne.s32.totalorder %s47, %s48
    %p60 = scmp.eq.s32.totalorder %s43, 1
    %p61 = por %p59, %p60
    %p63 = scmp.ne.s32.totalorder %s48, %s62
    %p64 = scmp.eq.s32.totalorder %s43, 0
    %p65 = por %p63, %p64
    %s67 = sadd.s32 %s66, 1
    %p70 = scmp.eq.s32.totalorder %s37, 1
    %p71 = scmp.ne.s32.totalorder %s66, %s68
    %p72 = scmp.eq.s32.totalorder %s37, 0
    %p73 = por %p71, %p72
    %p74 = scmp.ne.s32.totalorder %s66, %s68
    %p75 = scmp.eq.s32.totalorder %s42, 1
    %p76 = por %p74, %p75
    %p77 = scmp.ne.s32.totalorder %s68, %s69
    %p78 = scmp.eq.s32.totalorder %s42, 0
    %p79 = por %p77, %p78
    %p80 = scmp.ne.s32.totalorder %s68, %s69
    %p81 = scmp.eq.s32.totalorder %s43, 1
    %p82 = por %p80, %p81
    %p84 = scmp.ne.s32.totalorder %s69, %s83
    %p85 = scmp.eq.s32.totalorder %s43, 0
    %p86 = por %p84, %p85
    %s88 = sadd.s32 %s87, 1
    %p91 = scmp.eq.s32.totalorder %s37, 1
    %p92 = scmp.ne.s32.totalorder %s87, %s89
    %p93 = scmp.eq.s32.totalorder %s37, 0
    %p94 = por %p92, %p93
    %p95 = scmp.ne.s32.totalorder %s87, %s89
    %p96 = scmp.eq.s32.totalorder %s42, 1
    %p97 = por %p95, %p96
    %p98 = scmp.ne.s32.totalorder %s89, %s90
    %p99 = scmp.eq.s32.totalorder %s42, 0
    %p100 = por %p98, %p99
    %p101 = scmp.ne.s32.totalorder %s89, %s90
    %p102 = scmp.eq.s32.totalorder %s43, 1
    %p103 = por %p101, %p102
    %p105 = scmp.ne.s32.totalorder %s90, %s104
    %p106 = scmp.eq.s32.totalorder %s43, 0
    %p107 = por %p105, %p106
    %s109 = sadd.s32 %s108, 1
    %p112 = scmp.eq.s32.totalorder %s37, 1
    %p113 = scmp.ne.s32.totalorder %s108, %s110
    %p114 = scmp.eq.s32.totalorder %s37, 0
    %p115 = por %p113, %p114
    %p116 = scmp.ne.s32.totalorder %s108, %s110
    %p117 = scmp.eq.s32.totalorder %s42, 1
    %p118 = por %p116, %p117
    %p119 = scmp.ne.s32.totalorder %s110, %s111
    %p120 = scmp.eq.s32.totalorder %s42, 0
    %p121 = por %p119, %p120
    %p122 = scmp.ne.s32.totalorder %s110, %s111
    %p123 = scmp.eq.s32.totalorder %s43, 1
    %p124 = por %p122, %p123
    %p126 = scmp.ne.s32.totalorder %s111, %s125
    %p127 = scmp.eq.s32.totalorder %s43, 0
    %p128 = por %p126, %p127
    %s130 = sadd.s32 %s129, 1
    %p133 = scmp.eq.s32.totalorder %s37, 1
    %p134 = scmp.ne.s32.totalorder %s129, %s131
    %p135 = scmp.eq.s32.totalorder %s37, 0
    %p136 = por %p134, %p135
    %p137 = scmp.ne.s32.totalorder %s129, %s131
    %p138 = scmp.eq.s32.totalorder %s42, 1
    %p139 = por %p137, %p138
    %p140 = scmp.ne.s32.totalorder %s131, %s132
    %p141 = scmp.eq.s32.totalorder %s42, 0
    %p142 = por %p140, %p141
    %p143 = scmp.ne.s32.totalorder %s131, %s132
    %p144 = scmp.eq.s32.totalorder %s43, 1
    %p145 = por %p143, %p144
    %p147 = scmp.ne.s32.totalorder %s132, %s146
    %p148 = scmp.eq.s32.totalorder %s43, 0
    %p149 = por %p147, %p148
    %s151 = sadd.s32 %s150, 1
    %p154 = scmp.eq.s32.totalorder %s37, 1
    %p155 = scmp.ne.s32.totalorder %s150, %s152
    %p156 = scmp.eq.s32.totalorder %s37, 0
    %p157 = por %p155, %p156
    %p158 = scmp.ne.s32.totalorder %s150, %s152
    %p159 = scmp.eq.s32.totalorder %s42, 1
    %p160 = por %p158, %p159
    %p161 = scmp.ne.s32.totalorder %s152, %s153
    %p162 = scmp.eq.s32.totalorder %s42, 0
    %p163 = por %p161, %p162
    %p164 = scmp.ne.s32.totalorder %s152, %s153
    %p165 = scmp.eq.s32.totalorder %s43, 1
    %p166 = por %p164, %p165
    %p168 = scmp.ne.s32.totalorder %s153, %s167
    %p169 = scmp.eq.s32.totalorder %s43, 0
    %p170 = por %p168, %p169
    %s171 = ssub.s32 %s37, %s44
    %p172 = scmp.eq.s32.totalorder %s171, 0
    %s174 = sadd.s32 %s173, 1
    %s175 = scalar_select %p172, %s173, %s174
    %p178 = pneg %p172
    %p179 = scmp.eq.s32.totalorder %s37, 1
    %p180 = por %p178, %p179
    %p181 = scmp.ne.s32.totalorder %s173, %s176
    %p182 = scmp.eq.s32.totalorder %s37, 0
    %p183 = por %p181, %p182
    %p184 = scmp.ne.s32.totalorder %s173, %s176
    %p185 = scmp.eq.s32.totalorder %s42, 1
    %p186 = por %p184, %p185
    %p187 = scmp.ne.s32.totalorder %s176, %s177
    %p188 = scmp.eq.s32.totalorder %s42, 0
    %p189 = por %p187, %p188
    %p190 = scmp.ne.s32.totalorder %s176, %s177
    %p191 = scmp.eq.s32.totalorder %s43, 1
    %p192 = por %p190, %p191
    %p194 = scmp.ne.s32.totalorder %s177, %s193
    %p195 = scmp.eq.s32.totalorder %s43, 0
    %p196 = por %p194, %p195
    %s197 = ssub.s32 %s37, %s44
    %p198 = scmp.eq.s32.totalorder %s197, 0
    %s200 = sadd.s32 %s199, 1
    %s201 = scalar_select %p198, %s199, %s200
    %p204 = pneg %p198
    %p205 = scmp.eq.s32.totalorder %s37, 1
    %p206 = por %p204, %p205
    %p207 = scmp.ne.s32.totalorder %s199, %s202
    %p208 = scmp.eq.s32.totalorder %s37, 0
    %p209 = por %p207, %p208
    %p210 = scmp.ne.s32.totalorder %s199, %s202
    %p211 = scmp.eq.s32.totalorder %s42, 1
    %p212 = por %p210, %p211
    %p213 = scmp.ne.s32.totalorder %s202, %s203
    %p214 = scmp.eq.s32.totalorder %s42, 0
    %p215 = por %p213, %p214
    %p216 = scmp.ne.s32.totalorder %s202, %s203
    %p217 = scmp.eq.s32.totalorder %s43, 1
    %p218 = por %p216, %p217
    %p220 = scmp.ne.s32.totalorder %s203, %s219
    %p221 = scmp.eq.s32.totalorder %s43, 0
    %p222 = por %p220, %p221
    %s223 = ssub.s32 %s37, %s44
    %p224 = scmp.eq.s32.totalorder %s223, 0
    %s226 = sadd.s32 %s225, 1
    %s227 = scalar_select %p224, %s225, %s226
    %p230 = pneg %p224
    %p231 = scmp.eq.s32.totalorder %s37, 1
    %p232 = por %p230, %p231
    %p233 = scmp.ne.s32.totalorder %s225, %s228
    %p234 = scmp.eq.s32.totalorder %s37, 0
    %p235 = por %p233, %p234
    %p236 = scmp.ne.s32.totalorder %s225, %s228
    %p237 = scmp.eq.s32.totalorder %s42, 1
    %p238 = por %p236, %p237
    %p239 = scmp.ne.s32.totalorder %s228, %s229
    %p240 = scmp.eq.s32.totalorder %s42, 0
    %p241 = por %p239, %p240
    %p242 = scmp.ne.s32.totalorder %s228, %s229
    %p243 = scmp.eq.s32.totalorder %s43, 1
    %p244 = por %p242, %p243
    %p246 = scmp.ne.s32.totalorder %s229, %s245
    %p247 = scmp.eq.s32.totalorder %s43, 0
    %p248 = por %p246, %p247
    %s249 = ssub.s32 %s37, %s44
    %p250 = scmp.eq.s32.totalorder %s249, 0
    %s252 = sadd.s32 %s251, 1
    %s253 = scalar_select %p250, %s251, %s252
    %p256 = pneg %p250
    %p257 = scmp.eq.s32.totalorder %s37, 1
    %p258 = por %p256, %p257
    %p259 = scmp.ne.s32.totalorder %s251, %s254
    %p260 = scmp.eq.s32.totalorder %s37, 0
    %p261 = por %p259, %p260
    %p262 = scmp.ne.s32.totalorder %s251, %s254
    %p263 = scmp.eq.s32.totalorder %s42, 1
    %p264 = por %p262, %p263
    %p265 = scmp.ne.s32.totalorder %s254, %s255
    %p266 = scmp.eq.s32.totalorder %s42, 0
    %p267 = por %p265, %p266
    %p268 = scmp.ne.s32.totalorder %s254, %s255
    %p269 = scmp.eq.s32.totalorder %s43, 1
    %p270 = por %p268, %p269
    %p272 = scmp.ne.s32.totalorder %s255, %s271
    %p273 = scmp.eq.s32.totalorder %s43, 0
    %p274 = por %p272, %p273
    %s275 = ssub.s32 %s37, %s44
    %p276 = scmp.eq.s32.totalorder %s275, 0
    %s278 = sadd.s32 %s277, 1
    %s279 = scalar_select %p276, %s277, %s278
    %p282 = pneg %p276
    %p283 = scmp.eq.s32.totalorder %s37, 1
    %p284 = por %p282, %p283
    %p285 = scmp.ne.s32.totalorder %s277, %s280
    %p286 = scmp.eq.s32.totalorder %s37, 0
    %p287 = por %p285, %p286
    %p288 = scmp.ne.s32.totalorder %s277, %s280
    %p289 = scmp.eq.s32.totalorder %s42, 1
    %p290 = por %p288, %p289
    %p291 = scmp.ne.s32.totalorder %s280, %s281
    %p292 = scmp.eq.s32.totalorder %s42, 0
    %p293 = por %p291, %p292
    %p294 = scmp.ne.s32.totalorder %s280, %s281
    %p295 = scmp.eq.s32.totalorder %s43, 1
    %p296 = por %p294, %p295
    %p298 = scmp.ne.s32.totalorder %s281, %s297
    %p299 = scmp.eq.s32.totalorder %s43, 0
    %p300 = por %p298, %p299
    %s301 = ssub.s32 %s37, %s44
    %p302 = scmp.eq.s32.totalorder %s301, 0
    %s304 = sadd.s32 %s303, 1
    %s305 = scalar_select %p302, %s303, %s304
    %p308 = pneg %p302
    %p309 = scmp.eq.s32.totalorder %s37, 1
    %p310 = por %p308, %p309
    %p311 = scmp.ne.s32.totalorder %s303, %s306
    %p312 = scmp.eq.s32.totalorder %s37, 0
    %p313 = por %p311, %p312
    %p314 = scmp.ne.s32.totalorder %s303, %s306
    %p315 = scmp.eq.s32.totalorder %s42, 1
    %p316 = por %p314, %p315
    %p317 = scmp.ne.s32.totalorder %s306, %s307
    %p318 = scmp.eq.s32.totalorder %s42, 0
    %p319 = por %p317, %p318
    %p320 = scmp.ne.s32.totalorder %s306, %s307
    %p321 = scmp.eq.s32.totalorder %s43, 1
    %p322 = por %p320, %p321
    %p324 = scmp.ne.s32.totalorder %s307, %s323
    %p325 = scmp.eq.s32.totalorder %s43, 0
    %p326 = por %p324, %p325
    %s327 = ssub.s32 %s37, %s44
    %p328 = scmp.eq.s32.totalorder %s327, 0
    %s330 = sadd.s32 %s329, 1
    %s331 = scalar_select %p328, %s329, %s330
    %p334 = pneg %p328
    %p335 = scmp.eq.s32.totalorder %s37, 1
    %p336 = por %p334, %p335
    %p337 = scmp.ne.s32.totalorder %s329, %s332
    %p338 = scmp.eq.s32.totalorder %s37, 0
    %p339 = por %p337, %p338
    %p340 = scmp.ne.s32.totalorder %s329, %s332
    %p341 = scmp.eq.s32.totalorder %s42, 1
    %p342 = por %p340, %p341
    %p343 = scmp.ne.s32.totalorder %s332, %s333
    %p344 = scmp.eq.s32.totalorder %s42, 0
    %p345 = por %p343, %p344
    %p346 = scmp.ne.s32.totalorder %s332, %s333
    %p347 = scmp.eq.s32.totalorder %s43, 1
    %p348 = por %p346, %p347
    %p350 = scmp.ne.s32.totalorder %s333, %s349
    %p351 = scmp.eq.s32.totalorder %s43, 0
    %p352 = por %p350, %p351
    %s353 = ssub.s32 %s37, %s44
    %p354 = scmp.eq.s32.totalorder %s353, 0
    %s356 = sadd.s32 %s355, 1
    %s357 = scalar_select %p354, %s355, %s356
    %p360 = pneg %p354
    %p361 = scmp.eq.s32.totalorder %s37, 1
    %p362 = por %p360, %p361
    %p363 = scmp.ne.s32.totalorder %s355, %s358
    %p364 = scmp.eq.s32.totalorder %s37, 0
    %p365 = por %p363, %p364
    %p366 = scmp.ne.s32.totalorder %s355, %s358
    %p367 = scmp.eq.s32.totalorder %s42, 1
    %p368 = por %p366, %p367
    %p369 = scmp.ne.s32.totalorder %s358, %s359
    %p370 = scmp.eq.s32.totalorder %s42, 0
    %p371 = por %p369, %p370
    %p372 = scmp.ne.s32.totalorder %s358, %s359
    %p373 = scmp.eq.s32.totalorder %s43, 1
    %p374 = por %p372, %p373
    %p376 = scmp.ne.s32.totalorder %s359, %s375
    %p377 = scmp.eq.s32.totalorder %s43, 0
    %p378 = por %p376, %p377
    %s379 = ssub.s32 %s37, %s44
    %p380 = scmp.eq.s32.totalorder %s379, 0
    %s382 = sadd.s32 %s381, 1
    %s383 = scalar_select %p380, %s381, %s382
    %p386 = pneg %p380
    %p387 = scmp.eq.s32.totalorder %s37, 1
    %p388 = por %p386, %p387
    %p389 = scmp.ne.s32.totalorder %s381, %s384
    %p390 = scmp.eq.s32.totalorder %s37, 0
    %p391 = por %p389, %p390
    %p392 = scmp.ne.s32.totalorder %s381, %s384
    %p393 = scmp.eq.s32.totalorder %s42, 1
    %p394 = por %p392, %p393
    %p395 = scmp.ne.s32.totalorder %s384, %s385
    %p396 = scmp.eq.s32.totalorder %s42, 0
    %p397 = por %p395, %p396
    %p398 = scmp.ne.s32.totalorder %s384, %s385
    %p399 = scmp.eq.s32.totalorder %s43, 1
    %p400 = por %p398, %p399
    %p402 = scmp.ne.s32.totalorder %s385, %s401
    %p403 = scmp.eq.s32.totalorder %s43, 0
    %p404 = por %p402, %p403
    %s405 = ssub.s32 %s37, %s44
    %p406 = scmp.eq.s32.totalorder %s405, 0
    %s408 = sadd.s32 %s407, 1
    %s409 = scalar_select %p406, %s407, %s408
    %p412 = pneg %p406
    %p413 = scmp.eq.s32.totalorder %s37, 1
    %p414 = por %p412, %p413
    %p415 = scmp.ne.s32.totalorder %s407, %s410
    %p416 = scmp.eq.s32.totalorder %s37, 0
    %p417 = por %p415, %p416
    %p418 = scmp.ne.s32.totalorder %s407, %s410
    %p419 = scmp.eq.s32.totalorder %s42, 1
    %p420 = por %p418, %p419
    %p421 = scmp.ne.s32.totalorder %s410, %s411
    %p422 = scmp.eq.s32.totalorder %s42, 0
    %p423 = por %p421, %p422
    %p424 = scmp.ne.s32.totalorder %s410, %s411
    %p425 = scmp.eq.s32.totalorder %s43, 1
    %p426 = por %p424, %p425
    %p428 = scmp.ne.s32.totalorder %s411, %s427
    %p429 = scmp.eq.s32.totalorder %s43, 0
    %p430 = por %p428, %p429
    %s431 = ssub.s32 %s37, %s44
    %p432 = scmp.eq.s32.totalorder %s431, 0
    %s434 = sadd.s32 %s433, 1
    %s435 = scalar_select %p432, %s433, %s434
    %p438 = pneg %p432
    %p439 = scmp.eq.s32.totalorder %s37, 1
    %p440 = por %p438, %p439
    %p441 = scmp.ne.s32.totalorder %s433, %s436
    %p442 = scmp.eq.s32.totalorder %s37, 0
    %p443 = por %p441, %p442
    %p444 = scmp.ne.s32.totalorder %s433, %s436
    %p445 = scmp.eq.s32.totalorder %s42, 1
    %p446 = por %p444, %p445
    %p447 = scmp.ne.s32.totalorder %s436, %s437
    %p448 = scmp.eq.s32.totalorder %s42, 0
    %p449 = por %p447, %p448
    %p450 = scmp.ne.s32.totalorder %s436, %s437
    %p451 = scmp.eq.s32.totalorder %s43, 1
    %p452 = por %p450, %p451
    %p454 = scmp.ne.s32.totalorder %s437, %s453
    %p455 = scmp.eq.s32.totalorder %s43, 0
    %p456 = por %p454, %p455
    %s457 = ssub.s32 %s37, %s44
    %p458 = scmp.eq.s32.totalorder %s457, 0
    %s460 = sadd.s32 %s459, 1
    %s461 = scalar_select %p458, %s459, %s460
    %p464 = pneg %p458
    %p465 = scmp.eq.s32.totalorder %s37, 1
    %p466 = por %p464, %p465
    %p467 = scmp.ne.s32.totalorder %s459, %s462
    %p468 = scmp.eq.s32.totalorder %s37, 0
    %p469 = por %p467, %p468
    %p470 = scmp.ne.s32.totalorder %s459, %s462
    %p471 = scmp.eq.s32.totalorder %s42, 1
    %p472 = por %p470, %p471
    %p473 = scmp.ne.s32.totalorder %s462, %s463
    %p474 = scmp.eq.s32.totalorder %s42, 0
    %p475 = por %p473, %p474
    %p476 = scmp.ne.s32.totalorder %s462, %s463
    %p477 = scmp.eq.s32.totalorder %s43, 1
    %p478 = por %p476, %p477
    %p480 = scmp.ne.s32.totalorder %s463, %s479
    %p481 = scmp.eq.s32.totalorder %s43, 0
    %p482 = por %p480, %p481
    %s484 = sadd.s32 %s483, 1
    %p487 = scmp.eq.s32.totalorder %s37, 1
    %p488 = scmp.ne.s32.totalorder %s483, %s485
    %p489 = scmp.eq.s32.totalorder %s37, 0
    %p490 = por %p488, %p489
    %p491 = scmp.ne.s32.totalorder %s483, %s485
    %p492 = scmp.eq.s32.totalorder %s42, 1
    %p493 = por %p491, %p492
    %p494 = scmp.ne.s32.totalorder %s485, %s486
    %p495 = scmp.eq.s32.totalorder %s42, 0
    %p496 = por %p494, %p495
    %p497 = scmp.ne.s32.totalorder %s485, %s486
    %p498 = scmp.eq.s32.totalorder %s43, 1
    %p499 = por %p497, %p498
    %p501 = scmp.ne.s32.totalorder %s486, %s500
    %p502 = scmp.eq.s32.totalorder %s43, 0
    %p503 = por %p501, %p502
    %s505 = sadd.s32 %s504, 1
    %p508 = scmp.eq.s32.totalorder %s37, 1
    %p509 = scmp.ne.s32.totalorder %s504, %s506
    %p510 = scmp.eq.s32.totalorder %s37, 0
    %p511 = por %p509, %p510
    %p512 = scmp.ne.s32.totalorder %s504, %s506
    %p513 = scmp.eq.s32.totalorder %s42, 1
    %p514 = por %p512, %p513
    %p515 = scmp.ne.s32.totalorder %s506, %s507
    %p516 = scmp.eq.s32.totalorder %s42, 0
    %p517 = por %p515, %p516
    %p518 = scmp.ne.s32.totalorder %s506, %s507
    %p519 = scmp.eq.s32.totalorder %s43, 1
    %p520 = por %p518, %p519
    %p522 = scmp.ne.s32.totalorder %s507, %s521
    %p523 = scmp.eq.s32.totalorder %s43, 0
    %p524 = por %p522, %p523
    %s526 = sadd.s32 %s525, 1
    %p529 = scmp.eq.s32.totalorder %s37, 1
    %p530 = scmp.ne.s32.totalorder %s525, %s527
    %p531 = scmp.eq.s32.totalorder %s37, 0
    %p532 = por %p530, %p531
    %p533 = scmp.ne.s32.totalorder %s525, %s527
    %p534 = scmp.eq.s32.totalorder %s42, 1
    %p535 = por %p533, %p534
    %p536 = scmp.ne.s32.totalorder %s527, %s528
    %p537 = scmp.eq.s32.totalorder %s42, 0
    %p538 = por %p536, %p537
    %p539 = scmp.ne.s32.totalorder %s527, %s528
    %p540 = scmp.eq.s32.totalorder %s43, 1
    %p541 = por %p539, %p540
    %p543 = scmp.ne.s32.totalorder %s528, %s542
    %p544 = scmp.eq.s32.totalorder %s43, 0
    %p545 = por %p543, %p544
    %s547 = sadd.s32 %s546, 1
    %p550 = scmp.eq.s32.totalorder %s37, 1
    %p551 = scmp.ne.s32.totalorder %s546, %s548
    %p552 = scmp.eq.s32.totalorder %s37, 0
    %p553 = por %p551, %p552
    %p554 = scmp.ne.s32.totalorder %s546, %s548
    %p555 = scmp.eq.s32.totalorder %s42, 1
    %p556 = por %p554, %p555
    %p557 = scmp.ne.s32.totalorder %s548, %s549
    %p558 = scmp.eq.s32.totalorder %s42, 0
    %p559 = por %p557, %p558
    %p560 = scmp.ne.s32.totalorder %s548, %s549
    %p561 = scmp.eq.s32.totalorder %s43, 1
    %p562 = por %p560, %p561
    %p564 = scmp.ne.s32.totalorder %s549, %s563
    %p565 = scmp.eq.s32.totalorder %s43, 0
    %p566 = por %p564, %p565
    %s568 = sadd.s32 %s567, 1
    %p571 = scmp.eq.s32.totalorder %s37, 1
    %p572 = scmp.ne.s32.totalorder %s567, %s569
    %p573 = scmp.eq.s32.totalorder %s37, 0
    %p574 = por %p572, %p573
    %p575 = scmp.ne.s32.totalorder %s567, %s569
    %p576 = scmp.eq.s32.totalorder %s42, 1
    %p577 = por %p575, %p576
    %p578 = scmp.ne.s32.totalorder %s569, %s570
    %p579 = scmp.eq.s32.totalorder %s42, 0
    %p580 = por %p578, %p579
    %p581 = scmp.ne.s32.totalorder %s569, %s570
    %p582 = scmp.eq.s32.totalorder %s43, 1
    %p583 = por %p581, %p582
    %p585 = scmp.ne.s32.totalorder %s570, %s584
    %p586 = scmp.eq.s32.totalorder %s43, 0
    %p587 = por %p585, %p586
    %p588 = scmp.le.s32.totalorder 1, %s37
    %p589 = scmp.lt.s32.totalorder %s37, 3
    %p590 = pnand %p588, %p589
    %p591 = pneg %p590
    // Predicated region
    $region9: #{survey_classifier_forward.1} parent=5 // pred_check
      _
    $region10: #{survey_classifier_forward.1} parent=5 // pred_check_branch
      %593 = sbr.rel (%p590) target = $region12
    $region11: #{survey_classifier_forward.1} parent=5 // pred_region
      %s594 = ssub.s32 %s37, 1
      // Predicated region
      $region13: #{survey_classifier_forward.1} parent=11 // pred_check
        %p595 = pneg %p58
      $region14: #{survey_classifier_forward.1} parent=11 // pred_check_branch
        %597 = sbr.rel (%p595) target = $region16
      $region15: #{survey_classifier_forward.1} parent=11 // pred_region
        _
      $region16: #{survey_classifier_forward.1} parent=11 // pred_fallthru
        _
      // Predicated region
      $region17: #{survey_classifier_forward.1} parent=11 // pred_check
        %p598 = pneg %p79
      $region18: #{survey_classifier_forward.1} parent=11 // pred_check_branch
        %600 = sbr.rel (%p598) target = $region20
      $region19: #{survey_classifier_forward.1} parent=11 // pred_region
        _
      $region20: #{survey_classifier_forward.1} parent=11 // pred_fallthru
        _
      // Predicated region
      $region21: #{survey_classifier_forward.1} parent=11 // pred_check
        %p601 = pneg %p100
      $region22: #{survey_classifier_forward.1} parent=11 // pred_check_branch
        %603 = sbr.rel (%p601) target = $region24
      $region23: #{survey_classifier_forward.1} parent=11 // pred_region
        _
      $region24: #{survey_classifier_forward.1} parent=11 // pred_fallthru
        _
      // Predicated region
      $region25: #{survey_classifier_forward.1} parent=11 // pred_check
        %p604 = pneg %p121
      $region26: #{survey_classifier_forward.1} parent=11 // pred_check_branch
        %606 = sbr.rel (%p604) target = $region28
      $region27: #{survey_classifier_forward.1} parent=11 // pred_region
        _
      $region28: #{survey_classifier_forward.1} parent=11 // pred_fallthru
        _
      // Predicated region
      $region29: #{survey_classifier_forward.1} parent=11 // pred_check
        %p607 = pneg %p142
      $region30: #{survey_classifier_forward.1} parent=11 // pred_check_branch
        %609 = sbr.rel (%p607) target = $region32
      $region31: #{survey_classifier_forward.1} parent=11 // pred_region
        _
      $region32: #{survey_classifier_forward.1} parent=11 // pred_fallthru
        _
      // Predicated region
      $region33: #{survey_classifier_forward.1} parent=11 // pred_check
        %p610 = pneg %p163
      $region34: #{survey_classifier_forward.1} parent=11 // pred_check_branch
        %612 = sbr.rel (%p610) target = $region36
      $region35: #{survey_classifier_forward.1} parent=11 // pred_region
        _
      $region36: #{survey_classifier_forward.1} parent=11 // pred_fallthru
        _
      // Predicated region
      $region37: #{survey_classifier_forward.1} parent=11 // pred_check
        %p613 = pneg %p496
      $region38: #{survey_classifier_forward.1} parent=11 // pred_check_branch
        %615 = sbr.rel (%p613) target = $region40
      $region39: #{survey_classifier_forward.1} parent=11 // pred_region
        _
      $region40: #{survey_classifier_forward.1} parent=11 // pred_fallthru
        _
      // Predicated region
      $region41: #{survey_classifier_forward.1} parent=11 // pred_check
        %p616 = pneg %p517
      $region42: #{survey_classifier_forward.1} parent=11 // pred_check_branch
        %618 = sbr.rel (%p616) target = $region44
      $region43: #{survey_classifier_forward.1} parent=11 // pred_region
        _
      $region44: #{survey_classifier_forward.1} parent=11 // pred_fallthru
        _
      // Predicated region
      $region45: #{survey_classifier_forward.1} parent=11 // pred_check
        %p619 = pneg %p538
      $region46: #{survey_classifier_forward.1} parent=11 // pred_check_branch
        %621 = sbr.rel (%p619) target = $region48
      $region47: #{survey_classifier_forward.1} parent=11 // pred_region
        _
      $region48: #{survey_classifier_forward.1} parent=11 // pred_fallthru
        _
      // Predicated region
      $region49: #{survey_classifier_forward.1} parent=11 // pred_check
        %p622 = pneg %p559
      $region50: #{survey_classifier_forward.1} parent=11 // pred_check_branch
        %624 = sbr.rel (%p622) target = $region52
      $region51: #{survey_classifier_forward.1} parent=11 // pred_region
        _
      $region52: #{survey_classifier_forward.1} parent=11 // pred_fallthru
        _
    $region12: #{survey_classifier_forward.1} parent=5 // pred_fallthru
      _
    %p625 = scmp.lt.s32.totalorder %s37, 2
    // Predicated region
    $region53: #{survey_classifier_forward.1} parent=5 // pred_check
      %p626 = pneg %p625
    $region54: #{survey_classifier_forward.1} parent=5 // pred_check_branch
      %628 = sbr.rel (%p626) target = $region56
    $region55: #{survey_classifier_forward.1} parent=5 // pred_region
      // Predicated region
      $region57: #{survey_classifier_forward.1} parent=55 // pred_check
        %p629 = pneg %p183
      $region58: #{survey_classifier_forward.1} parent=55 // pred_check_branch
        %631 = sbr.rel (%p629) target = $region60
      $region59: #{survey_classifier_forward.1} parent=55 // pred_region
        %p632 = scmp.lt.s32.totalorder %s37, 1
        %s633 = scalar_select %p632, %s37, 1
        %s634 = smul.addr %s633, 4
        %s635 = smul.addr %s634, 4
        %s636 = scalar_lea.vmem %s7, %s635
      $region60: #{survey_classifier_forward.1} parent=55 // pred_fallthru
        _
      // Predicated region
      $region61: #{survey_classifier_forward.1} parent=55 // pred_check
        %p637 = pneg %p209
      $region62: #{survey_classifier_forward.1} parent=55 // pred_check_branch
        %639 = sbr.rel (%p637) target = $region64
      $region63: #{survey_classifier_forward.1} parent=55 // pred_region
        %p640 = scmp.lt.s32.totalorder %s37, 1
        %s641 = scalar_select %p640, %s37, 1
        %s642 = scalar_lea.vmem %s8, %s641
      $region64: #{survey_classifier_forward.1} parent=55 // pred_fallthru
        _
      // Predicated region
      $region65: #{survey_classifier_forward.1} parent=55 // pred_check
        %p643 = pneg %p235
      $region66: #{survey_classifier_forward.1} parent=55 // pred_check_branch
        %645 = sbr.rel (%p643) target = $region68
      $region67: #{survey_classifier_forward.1} parent=55 // pred_region
        %p646 = scmp.lt.s32.totalorder %s37, 1
        %s647 = scalar_select %p646, %s37, 1
        %s648 = smul.addr %s647, 4
        %s649 = smul.addr %s648, 4
        %s650 = scalar_lea.vmem %s9, %s649
      $region68: #{survey_classifier_forward.1} parent=55 // pred_fallthru
        _
      // Predicated region
      $region69: #{survey_classifier_forward.1} parent=55 // pred_check
        %p651 = pneg %p261
      $region70: #{survey_classifier_forward.1} parent=55 // pred_check_branch
        %653 = sbr.rel (%p651) target = $region72
      $region71: #{survey_classifier_forward.1} parent=55 // pred_region
        %p654 = scmp.lt.s32.totalorder %s37, 1
        %s655 = scalar_select %p654, %s37, 1
        %s656 = scalar_lea.vmem %s10, %s655
      $region72: #{survey_classifier_forward.1} parent=55 // pred_fallthru
        _
      // Predicated region
      $region73: #{survey_classifier_forward.1} parent=55 // pred_check
        %p657 = pneg %p287
      $region74: #{survey_classifier_forward.1} parent=55 // pred_check_branch
        %659 = sbr.rel (%p657) target = $region76
      $region75: #{survey_classifier_forward.1} parent=55 // pred_region
        %p660 = scmp.lt.s32.totalorder %s37, 1
        %s661 = scalar_select %p660, %s37, 1
        %s662 = scalar_lea.vmem %s11, %s661
      $region76: #{survey_classifier_forward.1} parent=55 // pred_fallthru
        _
      // Predicated region
      $region77: #{survey_classifier_forward.1} parent=55 // pred_check
        %p663 = pneg %p313
      $region78: #{survey_classifier_forward.1} parent=55 // pred_check_branch
        %665 = sbr.rel (%p663) target = $region80
      $region79: #{survey_classifier_forward.1} parent=55 // pred_region
        %p666 = scmp.lt.s32.totalorder %s37, 1
        %s667 = scalar_select %p666, %s37, 1
        %s668 = scalar_lea.vmem %s12, %s667
      $region80: #{survey_classifier_forward.1} parent=55 // pred_fallthru
        _
      // Predicated region
      $region81: #{survey_classifier_forward.1} parent=55 // pred_check
        %p669 = pneg %p339
      $region82: #{survey_classifier_forward.1} parent=55 // pred_check_branch
        %671 = sbr.rel (%p669) target = $region84
      $region83: #{survey_classifier_forward.1} parent=55 // pred_region
        %p672 = scmp.lt.s32.totalorder %s37, 1
        %s673 = scalar_select %p672, %s37, 1
        %s674 = smul.addr %s673, 4
        %s675 = smul.addr %s674, 4
        %s676 = scalar_lea.vmem %s13, %s675
      $region84: #{survey_classifier_forward.1} parent=55 // pred_fallthru
        _
      // Predicated region
      $region85: #{survey_classifier_forward.1} parent=55 // pred_check
        %p677 = pneg %p365
      $region86: #{survey_classifier_forward.1} parent=55 // pred_check_branch
        %679 = sbr.rel (%p677) target = $region88
      $region87: #{survey_classifier_forward.1} parent=55 // pred_region
        %p680 = scmp.lt.s32.totalorder %s37, 1
        %s681 = scalar_select %p680, %s37, 1
        %s682 = scalar_lea.vmem %s14, %s681
      $region88: #{survey_classifier_forward.1} parent=55 // pred_fallthru
        _
      // Predicated region
      $region89: #{survey_classifier_forward.1} parent=55 // pred_check
        %p683 = pneg %p391
      $region90: #{survey_classifier_forward.1} parent=55 // pred_check_branch
        %685 = sbr.rel (%p683) target = $region92
      $region91: #{survey_classifier_forward.1} parent=55 // pred_region
        %p686 = scmp.lt.s32.totalorder %s37, 1
        %s687 = scalar_select %p686, %s37, 1
        %s688 = smul.addr %s687, 8
        %s689 = smul.addr %s688, 4
        %s690 = scalar_lea.vmem %s15, %s689
      $region92: #{survey_classifier_forward.1} parent=55 // pred_fallthru
        _
      // Predicated region
      $region93: #{survey_classifier_forward.1} parent=55 // pred_check
        %p691 = pneg %p417
      $region94: #{survey_classifier_forward.1} parent=55 // pred_check_branch
        %693 = sbr.rel (%p691) target = $region96
      $region95: #{survey_classifier_forward.1} parent=55 // pred_region
        %p694 = scmp.lt.s32.totalorder %s37, 1
        %s695 = scalar_select %p694, %s37, 1
        %s696 = scalar_lea.vmem %s16, %s695
      $region96: #{survey_classifier_forward.1} parent=55 // pred_fallthru
        _
      // Predicated region
      $region97: #{survey_classifier_forward.1} parent=55 // pred_check
        %p697 = pneg %p443
      $region98: #{survey_classifier_forward.1} parent=55 // pred_check_branch
        %699 = sbr.rel (%p697) target = $region100
      $region99: #{survey_classifier_forward.1} parent=55 // pred_region
        %p700 = scmp.lt.s32.totalorder %s37, 1
        %s701 = scalar_select %p700, %s37, 1
        %s702 = scalar_lea.vmem %s17, %s701
      $region100: #{survey_classifier_forward.1} parent=55 // pred_fallthru
        _
      // Predicated region
      $region101: #{survey_classifier_forward.1} parent=55 // pred_check
        %p703 = pneg %p469
      $region102: #{survey_classifier_forward.1} parent=55 // pred_check_branch
        %705 = sbr.rel (%p703) target = $region104
      $region103: #{survey_classifier_forward.1} parent=55 // pred_region
        %p706 = scmp.lt.s32.totalorder %s37, 1
        %s707 = scalar_select %p706, %s37, 1
        %s708 = scalar_lea.vmem %s18, %s707
      $region104: #{survey_classifier_forward.1} parent=55 // pred_fallthru
        _
    $region56: #{survey_classifier_forward.1} parent=5 // pred_fallthru
      _
    %p709 = scmp.le.s32.totalorder 1, %s37
    %p710 = scmp.lt.s32.totalorder %s37, 3
    %p711 = pnand %p709, %p710
    %p712 = pneg %p711
    // Predicated region
    $region105: #{survey_classifier_forward.1} parent=5 // pred_check
      _
    $region106: #{survey_classifier_forward.1} parent=5 // pred_check_branch
      %714 = sbr.rel (%p711) target = $region108
    $region107: #{survey_classifier_forward.1} parent=5 // pred_region
      %s715 = ssub.s32 %s37, 1
      %p716 = pneg %p58
      %p717 = pneg %p55
      %p718 = pneg %p79
      %p719 = pneg %p76
      %p720 = pneg %p100
      %p721 = pneg %p97
      %p722 = pneg %p121
      %p723 = pneg %p118
      %p724 = pneg %p142
      %p725 = pneg %p139
      %p726 = pneg %p163
      %p727 = pneg %p160
      %p728 = scmp.lt.s32.totalorder %s42, 1
      %s729 = scalar_select %p728, %s42, 1
      %s730 = smul.addr %s729, 4
      %s731 = smul.addr %s730, 4
      %s732 = scalar_lea.vmem %s7, %s731
      %p733 = pneg %p189
      %p734 = pneg %p186
      %p735 = scmp.lt.s32.totalorder %s42, 1
      %s736 = scalar_select %p735, %s42, 1
      %s737 = scalar_lea.vmem %s8, %s736
      %p738 = pneg %p215
      %p739 = pneg %p212
      %p740 = scmp.lt.s32.totalorder %s42, 1
      %s741 = scalar_select %p740, %s42, 1
      %s742 = smul.addr %s741, 4
      %s743 = smul.addr %s742, 4
      %s744 = scalar_lea.vmem %s9, %s743
      %p745 = pneg %p241
      %p746 = pneg %p238
      %p747 = scmp.lt.s32.totalorder %s42, 1
      %s748 = scalar_select %p747, %s42, 1
      %s749 = scalar_lea.vmem %s10, %s748
      %p750 = pneg %p267
      %p751 = pneg %p264
      %p752 = scmp.lt.s32.totalorder %s42, 1
      %s753 = scalar_select %p752, %s42, 1
      %s754 = scalar_lea.vmem %s11, %s753
      %p755 = pneg %p293
      %p756 = pneg %p290
      %p757 = scmp.lt.s32.totalorder %s42, 1
      %s758 = scalar_select %p757, %s42, 1
      %s759 = scalar_lea.vmem %s12, %s758
      %p760 = pneg %p319
      %p761 = pneg %p316
      %p762 = scmp.lt.s32.totalorder %s42, 1
      %s763 = scalar_select %p762, %s42, 1
      %s764 = smul.addr %s763, 4
      %s765 = smul.addr %s764, 4
      %s766 = scalar_lea.vmem %s13, %s765
      %p767 = pneg %p345
      %p768 = pneg %p342
      %p769 = scmp.lt.s32.totalorder %s42, 1
      %s770 = scalar_select %p769, %s42, 1
      %s771 = scalar_lea.vmem %s14, %s770
      %p772 = pneg %p371
      %p773 = pneg %p368
      %p774 = scmp.lt.s32.totalorder %s42, 1
      %s775 = scalar_select %p774, %s42, 1
      %s776 = smul.addr %s775, 8
      %s777 = smul.addr %s776, 4
      %s778 = scalar_lea.vmem %s15, %s777
      %p779 = pneg %p397
      %p780 = pneg %p394
      %p781 = scmp.lt.s32.totalorder %s42, 1
      %s782 = scalar_select %p781, %s42, 1
      %s783 = scalar_lea.vmem %s16, %s782
      %p784 = pneg %p423
      %p785 = pneg %p420
      %p786 = scmp.lt.s32.totalorder %s42, 1
      %s787 = scalar_select %p786, %s42, 1
      %s788 = scalar_lea.vmem %s17, %s787
      %p789 = pneg %p449
      %p790 = pneg %p446
      %p791 = scmp.lt.s32.totalorder %s42, 1
      %s792 = scalar_select %p791, %s42, 1
      %s793 = scalar_lea.vmem %s18, %s792
      %p794 = pneg %p475
      %p795 = pneg %p472
      %p796 = pneg %p496
      %p797 = pneg %p493
      %p798 = pneg %p517
      %p799 = pneg %p514
      %p800 = pneg %p538
      %p801 = pneg %p535
      %p802 = pneg %p559
      %p803 = pneg %p556
      %p804 = pneg %p580
      %p805 = pneg %p577
      %p806 = scmp.lt.s32.totalorder %s42, 1
      %s807 = scalar_select %p806, %s42, 1
      %s808 = smul.addr %s807, 4
      %s809 = smul.addr %s808, 4
      %s810 = scalar_lea.vmem %s7, %s809
      %p811 = scmp.lt.s32.totalorder %s42, 1
      %s812 = scalar_select %p811, %s42, 1
      %s813 = scalar_lea.vmem %s8, %s812
      %p814 = scmp.lt.s32.totalorder %s42, 1
      %s815 = scalar_select %p814, %s42, 1
      %s816 = smul.addr %s815, 4
      %s817 = smul.addr %s816, 4
      %s818 = scalar_lea.vmem %s9, %s817
      %p819 = scmp.lt.s32.totalorder %s42, 1
      %s820 = scalar_select %p819, %s42, 1
      %s821 = scalar_lea.vmem %s10, %s820
      %p822 = scmp.lt.s32.totalorder %s42, 1
      %s823 = scalar_select %p822, %s42, 1
      %s824 = scalar_lea.vmem %s11, %s823
      %p825 = scmp.lt.s32.totalorder %s42, 1
      %s826 = scalar_select %p825, %s42, 1
      %s827 = scalar_lea.vmem %s12, %s826
      %p828 = scmp.lt.s32.totalorder %s42, 1
      %s829 = scalar_select %p828, %s42, 1
      %s830 = smul.addr %s829, 4
      %s831 = smul.addr %s830, 4
      %s832 = scalar_lea.vmem %s13, %s831
      %p833 = scmp.lt.s32.totalorder %s42, 1
      %s834 = scalar_select %p833, %s42, 1
      %s835 = scalar_lea.vmem %s14, %s834
      %p836 = scmp.lt.s32.totalorder %s42, 1
      %s837 = scalar_select %p836, %s42, 1
      %s838 = smul.addr %s837, 8
      %s839 = smul.addr %s838, 4
      %s840 = scalar_lea.vmem %s15, %s839
      %p841 = scmp.lt.s32.totalorder %s42, 1
      %s842 = scalar_select %p841, %s42, 1
      %s843 = scalar_lea.vmem %s16, %s842
      %p844 = scmp.lt.s32.totalorder %s42, 1
      %s845 = scalar_select %p844, %s42, 1
      %s846 = scalar_lea.vmem %s17, %s845
      %p847 = scmp.lt.s32.totalorder %s42, 1
      %s848 = scalar_select %p847, %s42, 1
      %s849 = scalar_lea.vmem %s18, %s848
      %p851 = scmp.eq.s32.totalorder %s42, 0
      // Predicated region
      $region109: #{survey_classifier_forward.1} parent=107 // pred_check
        %p852 = pneg %p851
      $region110: #{survey_classifier_forward.1} parent=107 // pred_check_branch
        %854 = sbr.rel (%p852) target = $region112
      $region111: #{survey_classifier_forward.1} parent=107 // pred_region
        %s855 = sld [smem:[#allocation4]]
        %s856 = scalar_lea.vmem %s2, %s855
        %v857 = vld [vmem:[%s856] sm:$0x1]
        %vm858 = vcmask 253952
        %859 = vst.msk [vmem:[#allocation2] sm:$0x1] %vm858, %v857
        %s860 = sld [smem:[#allocation4 + $0x1]]
        %s861 = scalar_lea.vmem %s2, %s860
        %v862 = vld [vmem:[%s861] sm:$0x1]
        %863 = vst.msk [vmem:[#allocation2 + $0x1] sm:$0x1] %vm858, %v862
        %s864 = sld [smem:[#allocation4 + $0x2]]
        %s865 = scalar_lea.vmem %s2, %s864
        %v866 = vld [vmem:[%s865] sm:$0x1]
        %867 = vst.msk [vmem:[#allocation2 + $0x2] sm:$0x1] %vm858, %v866
        %s868 = sld [smem:[#allocation4 + $0x3]]
        %s869 = scalar_lea.vmem %s2, %s868
        %v870 = vld [vmem:[%s869] sm:$0x1]
        %871 = vst.msk [vmem:[#allocation2 + $0x3] sm:$0x1] %vm858, %v870
        %s872 = sld [smem:[#allocation4 + $0x4]]
        %s873 = scalar_lea.vmem %s2, %s872
        %v874 = vld [vmem:[%s873] sm:$0x1]
        %875 = vst.msk [vmem:[#allocation2 + $0x4] sm:$0x1] %vm858, %v874
        %s876 = sld [smem:[#allocation4 + $0x5]]
        %s877 = scalar_lea.vmem %s2, %s876
        %v878 = vld [vmem:[%s877] sm:$0x1]
        %879 = vst.msk [vmem:[#allocation2 + $0x5] sm:$0x1] %vm858, %v878
        %s880 = sld [smem:[#allocation4 + $0x6]]
        %s881 = scalar_lea.vmem %s2, %s880
        %v882 = vld [vmem:[%s881] sm:$0x1]
        %883 = vst.msk [vmem:[#allocation2 + $0x6] sm:$0x1] %vm858, %v882
        %s884 = sld [smem:[#allocation4 + $0x7]]
        %s885 = scalar_lea.vmem %s2, %s884
        %v886 = vld [vmem:[%s885] sm:$0x1]
        %887 = vst.msk [vmem:[#allocation2 + $0x7] sm:$0x1] %vm858, %v886
        %s888 = sld [smem:[#allocation4 + $0x8]]
        %s889 = scalar_lea.vmem %s2, %s888
        %v890 = vld [vmem:[%s889] sm:$0x1]
        %891 = vst.msk [vmem:[#allocation2 + $0x8] sm:$0x1] %vm858, %v890
        %s892 = sld [smem:[#allocation4 + $0x9]]
        %s893 = scalar_lea.vmem %s2, %s892
        %v894 = vld [vmem:[%s893] sm:$0x1]
        %895 = vst.msk [vmem:[#allocation2 + $0x9] sm:$0x1] %vm858, %v894
        %s896 = sld [smem:[#allocation4 + $0xa]]
        %s897 = scalar_lea.vmem %s2, %s896
        %v898 = vld [vmem:[%s897] sm:$0x1]
        %899 = vst.msk [vmem:[#allocation2 + $0xa] sm:$0x1] %vm858, %v898
        %s900 = sld [smem:[#allocation4 + $0xb]]
        %s901 = scalar_lea.vmem %s2, %s900
        %v902 = vld [vmem:[%s901] sm:$0x1]
        %903 = vst.msk [vmem:[#allocation2 + $0xb] sm:$0x1] %vm858, %v902
        %s904 = sld [smem:[#allocation4 + $0xc]]
        %s905 = scalar_lea.vmem %s2, %s904
        %v906 = vld [vmem:[%s905] sm:$0x1]
        %907 = vst.msk [vmem:[#allocation2 + $0xc] sm:$0x1] %vm858, %v906
        %s908 = sld [smem:[#allocation4 + $0xd]]
        %s909 = scalar_lea.vmem %s2, %s908
        %v910 = vld [vmem:[%s909] sm:$0x1]
        %911 = vst.msk [vmem:[#allocation2 + $0xd] sm:$0x1] %vm858, %v910
        %s912 = sld [smem:[#allocation4 + $0xe]]
        %s913 = scalar_lea.vmem %s2, %s912
        %v914 = vld [vmem:[%s913] sm:$0x1]
        %915 = vst.msk [vmem:[#allocation2 + $0xe] sm:$0x1] %vm858, %v914
        %s916 = sld [smem:[#allocation4 + $0xf]]
        %s917 = scalar_lea.vmem %s2, %s916
        %v918 = vld [vmem:[%s917] sm:$0x1]
        %919 = vst.msk [vmem:[#allocation2 + $0xf] sm:$0x1] %vm858, %v918
        %v920 = vld [vmem:[#allocation2] sm:$0xff]
        %v921 = vld [vmem:[#allocation2 + $0x8] sm:$0xff]
        %v922 = vld [vmem:[%s3] sm:$0xff]
        %v923 = vld [vmem:[%s3 + $0x8] sm:$0xff]
        %v924 = vadd.f32 %v920, %v922
        %v925 = vadd.f32 %v921, %v923
        %v926 = vld [vmem:[%s4] sm:$0x1]
        %v928 = vlaneseq
        %v929 = vshrl.u32 %v928, 7
        %v930 = vsub.s32 0, %v929
        %v931 = vrot.slane %v926, %v930
        %v933 = vadd.f32 %v924, %v931
        %v934 = vadd.f32 %v925, %v931
        %v935 = vld [vmem:[%s5] sm:$0x1]
        %v936 = vld [vmem:[%s6] sm:$0x1]
        %vm937 = vcmask 261120
        %v938 = vsel %vm937, %v933, 0.0
        %939 = vadd.xlane.f32.xlu0 %v938
        %v940 = vpop.xlane.xlu0 %939
        %v941 = vsel %vm937, %v934, 0.0
        %942 = vadd.xlane.f32.xlu0 %v941
        %v943 = vpop.xlane.xlu0 %942
        %v944 = vrcp.pop 32.0
        %v945 = vmul.f32 %v940, %v944
        %v946 = vmul.f32 %v943, %v944
        %v947 = vsub.f32 %v933, %v945
        %v948 = vsub.f32 %v934, %v946
        %v949 = vmul.f32 %v947, %v947
        %v950 = vmul.f32 %v948, %v948
        %v951 = vsel %vm937, %v949, 0.0
        %952 = vadd.xlane.f32.xlu0 %v951
        %v953 = vpop.xlane.xlu0 %952
        %v954 = vsel %vm937, %v950, 0.0
        %955 = vadd.xlane.f32.xlu0 %v954
        %v956 = vpop.xlane.xlu0 %955
        %v957 = vmul.f32 %v953, %v944
        %v958 = vmul.f32 %v956, %v944
        %v959 = vadd.f32 %v957, 1e-12
        %v960 = vadd.f32 %v958, 1e-12
        %v961 = vrsqrt.pop %v959
        %v962 = vrsqrt.pop %v960
        %v963 = vmul.f32 %v947, %v961
        %v964 = vmul.f32 %v948, %v962
        %v966 = vlaneseq
        %v967 = vshrl.u32 %v966, 7
        %v968 = vsub.s32 0, %v967
        %v969 = vrot.slane %v935, %v968
        %v971 = vmul.f32 %v963, %v969
        %v972 = vmul.f32 %v964, %v969
        %v974 = vlaneseq
        %v975 = vshrl.u32 %v974, 7
        %v976 = vsub.s32 0, %v975
        %v977 = vrot.slane %v936, %v976
        %v979 = vadd.f32 %v971, %v977
        %v980 = vadd.f32 %v972, %v977
        %981 = vst.msk [vmem:[#allocation2] sm:$0xff] %vm937, %v979
        %982 = vst.msk [vmem:[#allocation2 + $0x8] sm:$0xff] %vm937, %v980
      $region112: #{survey_classifier_forward.1} parent=107 // pred_fallthru
        _
      %v983 = vld [vmem:[#allocation2] sm:$0xff]
      %v984 = vld [vmem:[#allocation2 + $0x8] sm:$0xff]
      %v985 = vpack.c.bf16 %v984, %v983
      %v986 = vld [vmem:[%s810] sm:$0xf]
      %v987 = vld [vmem:[%s810 + $0x4] sm:$0xf]
      %v988 = vld [vmem:[%s810 + $0x8] sm:$0xf]
      %v989 = vld [vmem:[%s810 + $0xc] sm:$0xf]
      %v990 = vld [vmem:[%s813] sm:$0x1]
      %v992 = vlaneseq
      %v993 = vshrl.u32 %v992, 7
      %v994 = vsub.s32 0, %v993
      %v995 = vrot.slane %v990, %v994
      %v1001 = vunpack.c.l.b16 %v986
      %v1002 = vunpack.c.l.b16 %v987
      %v1003 = vunpack.c.l.b16 %v988
      %v1004 = vunpack.c.l.b16 %v989
      %v1005 = vpack.c.b16 %v1002, %v1001
      %v1006 = vpack.c.b16 %v1004, %v1003
      %vm1009 = vcmask 261120
      %v1011 = vsel %vm1009, %v985, 0
      %1013 = vmatprep.subr.bf16.mxu0 0
      %1014 = vmatpush1.bf16.msra.mxu0 0
      %1015 = vmatprep.subr.bf16.mxu0 0
      %1016 = vmatpush1.bf16.msra.mxu0 0
      %1017 = vmatprep.subr.bf16.mxu0 0
      %1018 = vmatpush1.bf16.msra.mxu0 0
      %1019 = vmatprep.subr.bf16.mxu0 0
      %1020 = vmatpush1.bf16.msra.mxu0 0
      %1021 = vmatprep.subr.bf16.mxu0 0
      %1022 = vmatpush1.bf16.msra.mxu0 0
      %1023 = vmatprep.subr.bf16.mxu0 0
      %1024 = vmatpush1.bf16.msra.mxu0 0
      %1025 = vmatprep.subr.bf16.mxu0 0
      %1026 = vmatpush1.bf16.msra.mxu0 %v1006
      %1027 = vmatprep.subr.bf16.mxu0 0
      %1028 = vmatpush1.bf16.msra.mxu0 %v1005
      %1029 = vmatprep.subr.bf16.mxu0 0
      %1030 = vmatpush2.bf16.msra.mxu0 0
      %1031 = vmatprep.subr.bf16.mxu0 0
      %1032 = vmatpush2.bf16.msra.mxu0 0
      %1033 = vmatprep.subr.bf16.mxu0 0
      %1034 = vmatpush2.bf16.msra.mxu0 0
      %1035 = vmatprep.subr.bf16.mxu0 0
      %1036 = vmatpush2.bf16.msra.mxu0 0
      %1037 = vmatprep.subr.bf16.mxu0 0
      %1038 = vmatpush2.bf16.msra.mxu0 0
      %1039 = vmatprep.subr.bf16.mxu0 0
      %1040 = vmatpush2.bf16.msra.mxu0 0
      %1041 = vmatprep.subr.bf16.mxu0 0
      %1042 = vmatpush2.bf16.msra.mxu0 0
      %1043 = vmatprep.subr.bf16.mxu0 0
      %1044 = vmatpush2.bf16.msra.mxu0 0
      %1045 = vmatprep.mubr.bf16.mxu0 0
      %1046 = vmatmul.mubr.bf16.gmra.mxu0 %v1011
      %v1047 = vpop.f32.mrf.mxu0
      %v1048 = vadd.f32 %v995, %v1047
      %v1049 = vpop.f32.mrf.mxu0
      %v1050 = vpop.f32.mrf.mxu0
      %v1051 = vadd.f32 %v995, %v1050
      %v1052 = vpop.f32.mrf.mxu0
      %1053 = vdwg.mxu0
      %v1054 = vld [vmem:[%s1] sm:$0xff]
      %v1055 = vld [vmem:[%s1 + $0x8] sm:$0xff]
      %v1056 = vld [vmem:[%s818] sm:$0xf]
      %v1057 = vld [vmem:[%s818 + $0x4] sm:$0xf]
      %v1058 = vld [vmem:[%s818 + $0x8] sm:$0xf]
      %v1059 = vld [vmem:[%s818 + $0xc] sm:$0xf]
      %v1060 = vmul.f32 %v1048, 0.25
      %v1061 = vmul.f32 %v1051, 0.25
      %v1062 = vpack.c.bf16 %v1061, %v1060
      %v1063 = vpack.c.bf16 %v1051, %v1048
      %1065 = vrot.lane.b32.xlu0 %v1063, 96
      %v1066 = vpop.permute.xlu0 %1065
      %vm1067 = vcmask 130048
      %v1069 = vsel %vm1067, %v1062, 0
      %v1072 = vsel %vm1067, %v1066, 0
      %1074 = vmatprep.subr.bf16.mxu0 0
      %1075 = vmatpush1.bf16.xpose.msra.mxu0 0
      %1076 = vmatprep.subr.bf16.mxu0 0
      %1077 = vmatpush1.bf16.xpose.msra.mxu0 0
      %1078 = vmatprep.subr.bf16.mxu0 0
      %1079 = vmatpush1.bf16.xpose.msra.mxu0 0
      %1080 = vmatprep.subr.bf16.mxu0 0
      %1081 = vmatpush1.bf16.xpose.msra.mxu0 0
      %1082 = vmatprep.subr.bf16.mxu0 0
      %1083 = vmatpush1.bf16.xpose.msra.mxu0 0
      %1084 = vmatprep.subr.bf16.mxu0 0
      %1085 = vmatpush1.bf16.xpose.msra.mxu0 0
      %1086 = vmatprep.subr.bf16.mxu0 0
      %1087 = vmatpush1.bf16.xpose.msra.mxu0 0
      %1088 = vmatprep.subr.bf16.mxu0 0
      %1089 = vmatpush1.bf16.xpose.msra.mxu0 %v1072
      %1090 = vmatprep.subr.bf16.mxu0 0
      %1091 = vmatpush2.bf16.xpose.msra.mxu0 0
      %1092 = vmatprep.subr.bf16.mxu0 0
      %1093 = vmatpush2.bf16.xpose.msra.mxu0 0
      %1094 = vmatprep.subr.bf16.mxu0 0
      %1095 = vmatpush2.bf16.xpose.msra.mxu0 0
      %1096 = vmatprep.subr.bf16.mxu0 0
      %1097 = vmatpush2.bf16.xpose.msra.mxu0 0
      %1098 = vmatprep.subr.bf16.mxu0 0
      %1099 = vmatpush2.bf16.xpose.msra.mxu0 0
      %1100 = vmatprep.subr.bf16.mxu0 0
      %1101 = vmatpush2.bf16.xpose.msra.mxu0 0
      %1102 = vmatprep.subr.bf16.mxu0 0
      %1103 = vmatpush2.bf16.xpose.msra.mxu0 0
      %1104 = vmatprep.subr.bf16.mxu0 0
      %1105 = vmatpush2.bf16.xpose.msra.mxu0 0
      %1106 = vmatprep.mubr.bf16.mxu0 0
      %1107 = vmatmul.mubr.bf16.gmra.mxu0 %v1069
      %v1108 = vpop.f32.mrf.mxu0
      %v1109 = vadd.f32 %v1054, %v1108
      %v1110 = vpop.f32.mrf.mxu0
      %v1111 = vpop.f32.mrf.mxu0
      %v1112 = vadd.f32 %v1055, %v1111
      %v1113 = vpop.f32.mrf.mxu0
      %1114 = vdwg.mxu0
      %v1115 = vsel %vm1067, %v1109, -inf
      %1116 = vmax.xlane.f32.xlu0 %v1115
      %v1117 = vpop.xlane.xlu0 %1116
      %v1118 = vsel %vm1067, %v1112, -inf
      %1119 = vmax.xlane.f32.xlu0 %v1118
      %v1120 = vpop.xlane.xlu0 %1119
      %v1121 = vsub.f32 %v1109, %v1117
      %v1122 = vsub.f32 %v1112, %v1120
      %v1123 = vmul.f32 %v1121, 1.442695
      %v1124 = vpow.pop %v1123
      %v1125 = vmul.f32 %v1122, 1.442695
      %v1126 = vpow.pop %v1125
      %v1127 = vsel %vm1067, %v1124, 0.0
      %1128 = vadd.xlane.f32.xlu0 %v1127
      %v1129 = vpop.xlane.xlu0 %1128
      %v1130 = vsel %vm1067, %v1126, 0.0
      %1131 = vadd.xlane.f32.xlu0 %v1130
      %v1132 = vpop.xlane.xlu0 %1131
      %v1133 = vrcp.pop %v1129
      %v1134 = vmul.f32 %v1124, %v1133
      %v1135 = vrcp.pop %v1132
      %v1136 = vmul.f32 %v1126, %v1135
      %v1137 = vpack.c.bf16 %v1136, %v1134
      %1138 = vrot.lane.b32.xlu0 %v1063, 64
      %v1139 = vpop.permute.xlu0 %1138
      %v1142 = vsel %vm1067, %v1137, 0
      %1144 = vmatprep.subr.bf16.mxu0 0
      %1145 = vmatpush1.bf16.msra.mxu0 0
      %1146 = vmatprep.subr.bf16.mxu0 0
      %1147 = vmatpush1.bf16.msra.mxu0 0
      %1148 = vmatprep.subr.bf16.mxu0 0
      %1149 = vmatpush1.bf16.msra.mxu0 0
      %1150 = vmatprep.subr.bf16.mxu0 0
      %1151 = vmatpush1.bf16.msra.mxu0 0
      %1152 = vmatprep.subr.bf16.mxu0 0
      %1153 = vmatpush1.bf16.msra.mxu0 0
      %1154 = vmatprep.subr.bf16.mxu0 0
      %1155 = vmatpush1.bf16.msra.mxu0 0
      %1156 = vmatprep.subr.bf16.mxu0 0
      %1157 = vmatpush1.bf16.msra.mxu0 0
      %1158 = vmatprep.subr.bf16.mxu0 0
      %1159 = vmatpush1.bf16.msra.mxu0 %v1139
      %1160 = vmatprep.subr.bf16.mxu0 0
      %1161 = vmatpush2.bf16.msra.mxu0 0
      %1162 = vmatprep.subr.bf16.mxu0 0
      %1163 = vmatpush2.bf16.msra.mxu0 0
      %1164 = vmatprep.subr.bf16.mxu0 0
      %1165 = vmatpush2.bf16.msra.mxu0 0
      %1166 = vmatprep.subr.bf16.mxu0 0
      %1167 = vmatpush2.bf16.msra.mxu0 0
      %1168 = vmatprep.subr.bf16.mxu0 0
      %1169 = vmatpush2.bf16.msra.mxu0 0
      %1170 = vmatprep.subr.bf16.mxu0 0
      %1171 = vmatpush2.bf16.msra.mxu0 0
      %1172 = vmatprep.subr.bf16.mxu0 0
      %1173 = vmatpush2.bf16.msra.mxu0 0
      %1174 = vmatprep.subr.bf16.mxu0 0
      %1175 = vmatpush2.bf16.msra.mxu0 0
      %1176 = vmatprep.mubr.bf16.mxu0 0
      %1177 = vmatmul.mubr.bf16.gmra.mxu0 %v1142
      %v1178 = vpop.f32.mrf.mxu0
      %v1179 = vadd.f32 0.0, %v1178
      %v1180 = vpop.f32.mrf.mxu0
      %v1181 = vpop.f32.mrf.mxu0
      %v1182 = vadd.f32 0.0, %v1181
      %v1183 = vpop.f32.mrf.mxu0
      %1184 = vdwg.mxu0
      %v1185 = vpack.c.bf16 %v1182, %v1179
      %1187 = vrot.lane.b32.xlu0 %v1062, 112
      %v1188 = vpop.permute.xlu0 %1187
      %1189 = vrot.lane.b32.xlu0 %v1063, 80
      %v1190 = vpop.permute.xlu0 %1189
      %v1192 = vsel %vm1067, %v1188, 0
      %v1195 = vsel %vm1067, %v1190, 0
      %1197 = vmatprep.subr.bf16.mxu0 0
      %1198 = vmatpush1.bf16.xpose.msra.mxu0 0
      %1199 = vmatprep.subr.bf16.mxu0 0
      %1200 = vmatpush1.bf16.xpose.msra.mxu0 0
      %1201 = vmatprep.subr.bf16.mxu0 0
      %1202 = vmatpush1.bf16.xpose.msra.mxu0 0
      %1203 = vmatprep.subr.bf16.mxu0 0
      %1204 = vmatpush1.bf16.xpose.msra.mxu0 0
      %1205 = vmatprep.subr.bf16.mxu0 0
      %1206 = vmatpush1.bf16.xpose.msra.mxu0 0
      %1207 = vmatprep.subr.bf16.mxu0 0
      %1208 = vmatpush1.bf16.xpose.msra.mxu0 0
      %1209 = vmatprep.subr.bf16.mxu0 0
      %1210 = vmatpush1.bf16.xpose.msra.mxu0 0
      %1211 = vmatprep.subr.bf16.mxu0 0
      %1212 = vmatpush1.bf16.xpose.msra.mxu0 %v1195
      %1213 = vmatprep.subr.bf16.mxu0 0
      %1214 = vmatpush2.bf16.xpose.msra.mxu0 0
      %1215 = vmatprep.subr.bf16.mxu0 0
      %1216 = vmatpush2.bf16.xpose.msra.mxu0 0
      %1217 = vmatprep.subr.bf16.mxu0 0
      %1218 = vmatpush2.bf16.xpose.msra.mxu0 0
      %1219 = vmatprep.subr.bf16.mxu0 0
      %1220 = vmatpush2.bf16.xpose.msra.mxu0 0
      %1221 = vmatprep.subr.bf16.mxu0 0
      %1222 = vmatpush2.bf16.xpose.msra.mxu0 0
      %1223 = vmatprep.subr.bf16.mxu0 0
      %1224 = vmatpush2.bf16.xpose.msra.mxu0 0
      %1225 = vmatprep.subr.bf16.mxu0 0
      %1226 = vmatpush2.bf16.xpose.msra.mxu0 0
      %1227 = vmatprep.subr.bf16.mxu0 0
      %1228 = vmatpush2.bf16.xpose.msra.mxu0 0
      %1229 = vmatprep.mubr.bf16.mxu0 0
      %1230 = vmatmul.mubr.bf16.gmra.mxu0 %v1192
      %v1231 = vpop.f32.mrf.mxu0
      %v1232 = vadd.f32 %v1054, %v1231
      %v1233 = vpop.f32.mrf.mxu0
      %v1234 = vpop.f32.mrf.mxu0
      %v1235 = vadd.f32 %v1055, %v1234
      %v1236 = vpop.f32.mrf.mxu0
      %1237 = vdwg.mxu0
      %v1238 = vsel %vm1067, %v1232, -inf
      %1239 = vmax.xlane.f32.xlu0 %v1238
      %v1240 = vpop.xlane.xlu0 %1239
      %v1241 = vsel %vm1067, %v1235, -inf
      %1242 = vmax.xlane.f32.xlu0 %v1241
      %v1243 = vpop.xlane.xlu0 %1242
      %v1244 = vsub.f32 %v1232, %v1240
      %v1245 = vsub.f32 %v1235, %v1243
      %v1246 = vmul.f32 %v1244, 1.442695
      %v1247 = vpow.pop %v1246
      %v1248 = vmul.f32 %v1245, 1.442695
      %v1249 = vpow.pop %v1248
      %v1250 = vsel %vm1067, %v1247, 0.0
      %1251 = vadd.xlane.f32.xlu0 %v1250
      %v1252 = vpop.xlane.xlu0 %1251
      %v1253 = vsel %vm1067, %v1249, 0.0
      %1254 = vadd.xlane.f32.xlu0 %v1253
      %v1255 = vpop.xlane.xlu0 %1254
      %v1256 = vrcp.pop %v1252
      %v1257 = vmul.f32 %v1247, %v1256
      %v1258 = vrcp.pop %v1255
      %v1259 = vmul.f32 %v1249, %v1258
      %v1260 = vpack.c.bf16 %v1259, %v1257
      %1261 = vrot.lane.b32.xlu0 %v1063, 48
      %v1262 = vpop.permute.xlu0 %1261
      %v1265 = vsel %vm1067, %v1260, 0
      %1267 = vmatprep.subr.bf16.mxu0 0
      %1268 = vmatpush1.bf16.msra.mxu0 0
      %1269 = vmatprep.subr.bf16.mxu0 0
      %1270 = vmatpush1.bf16.msra.mxu0 0
      %1271 = vmatprep.subr.bf16.mxu0 0
      %1272 = vmatpush1.bf16.msra.mxu0 0
      %1273 = vmatprep.subr.bf16.mxu0 0
      %1274 = vmatpush1.bf16.msra.mxu0 0
      %1275 = vmatprep.subr.bf16.mxu0 0
      %1276 = vmatpush1.bf16.msra.mxu0 0
      %1277 = vmatprep.subr.bf16.mxu0 0
      %1278 = vmatpush1.bf16.msra.mxu0 0
      %1279 = vmatprep.subr.bf16.mxu0 0
      %1280 = vmatpush1.bf16.msra.mxu0 0
      %1281 = vmatprep.subr.bf16.mxu0 0
      %1282 = vmatpush1.bf16.msra.mxu0 %v1262
      %1283 = vmatprep.subr.bf16.mxu0 0
      %1284 = vmatpush2.bf16.msra.mxu0 0
      %1285 = vmatprep.subr.bf16.mxu0 0
      %1286 = vmatpush2.bf16.msra.mxu0 0
      %1287 = vmatprep.subr.bf16.mxu0 0
      %1288 = vmatpush2.bf16.msra.mxu0 0
      %1289 = vmatprep.subr.bf16.mxu0 0
      %1290 = vmatpush2.bf16.msra.mxu0 0
      %1291 = vmatprep.subr.bf16.mxu0 0
      %1292 = vmatpush2.bf16.msra.mxu0 0
      %1293 = vmatprep.subr.bf16.mxu0 0
      %1294 = vmatpush2.bf16.msra.mxu0 0
      %1295 = vmatprep.subr.bf16.mxu0 0
      %1296 = vmatpush2.bf16.msra.mxu0 0
      %1297 = vmatprep.subr.bf16.mxu0 0
      %1298 = vmatpush2.bf16.msra.mxu0 0
      %1299 = vmatprep.mubr.bf16.mxu0 0
      %1300 = vmatmul.mubr.bf16.gmra.mxu0 %v1265
      %v1301 = vpop.f32.mrf.mxu0
      %v1302 = vadd.f32 0.0, %v1301
      %v1303 = vpop.f32.mrf.mxu0
      %v1304 = vpop.f32.mrf.mxu0
      %v1305 = vadd.f32 0.0, %v1304
      %v1306 = vpop.f32.mrf.mxu0
      %1307 = vdwg.mxu0
      %v1308 = vpack.c.bf16 %v1305, %v1302
      %v1311 = vunpack.c.l.b16 %v1058
      %v1312 = vunpack.c.l.b16 %v1059
      %v1313 = vpack.c.b16 %v1312, %v1311
      %v1316 = vsel %vm1067, %v1308, 0
      %1318 = vmatprep.subr.bf16.mxu0 0
      %1319 = vmatpush1.bf16.msra.mxu0 0
      %1320 = vmatprep.subr.bf16.mxu0 0
      %1321 = vmatpush1.bf16.msra.mxu0 0
      %1322 = vmatprep.subr.bf16.mxu0 0
      %1323 = vmatpush1.bf16.msra.mxu0 0
      %1324 = vmatprep.subr.bf16.mxu0 0
      %1325 = vmatpush1.bf16.msra.mxu0 0
      %1326 = vmatprep.subr.bf16.mxu0 0
      %1327 = vmatpush1.bf16.msra.mxu0 0
      %1328 = vmatprep.subr.bf16.mxu0 0
      %1329 = vmatpush1.bf16.msra.mxu0 0
      %1330 = vmatprep.subr.bf16.mxu0 0
      %1331 = vmatpush1.bf16.msra.mxu0 0
      %1332 = vmatprep.subr.bf16.mxu0 0
      %1333 = vmatpush1.bf16.msra.mxu0 %v1313
      %1334 = vmatprep.subr.bf16.mxu0 0
      %1335 = vmatpush2.bf16.msra.mxu0 0
      %1336 = vmatprep.subr.bf16.mxu0 0
      %1337 = vmatpush2.bf16.msra.mxu0 0
      %1338 = vmatprep.subr.bf16.mxu0 0
      %1339 = vmatpush2.bf16.msra.mxu0 0
      %1340 = vmatprep.subr.bf16.mxu0 0
      %1341 = vmatpush2.bf16.msra.mxu0 0
      %1342 = vmatprep.subr.bf16.mxu0 0
      %1343 = vmatpush2.bf16.msra.mxu0 0
      %1344 = vmatprep.subr.bf16.mxu0 0
      %1345 = vmatpush2.bf16.msra.mxu0 0
      %1346 = vmatprep.subr.bf16.mxu0 0
      %1347 = vmatpush2.bf16.msra.mxu0 0
      %1348 = vmatprep.subr.bf16.mxu0 0
      %1349 = vmatpush2.bf16.msra.mxu0 0
      %1350 = vmatprep.mubr.bf16.mxu0 0
      %1351 = vmatmul.mubr.bf16.gmra.mxu0 %v1316
      %v1352 = vpop.f32.mrf.mxu0
      %v1353 = vadd.f32 0.0, %v1352
      %v1354 = vpop.f32.mrf.mxu0
      %v1355 = vpop.f32.mrf.mxu0
      %v1356 = vadd.f32 0.0, %v1355
      %v1357 = vpop.f32.mrf.mxu0
      %1358 = vdwg.mxu0
      %v1361 = vunpack.c.l.b16 %v1056
      %v1362 = vunpack.c.l.b16 %v1057
      %v1363 = vpack.c.b16 %v1362, %v1361
      %v1366 = vsel %vm1067, %v1185, 0
      %1368 = vmatprep.subr.bf16.mxu0 0
      %1369 = vmatpush1.bf16.msra.mxu0 0
      %1370 = vmatprep.subr.bf16.mxu0 0
      %1371 = vmatpush1.bf16.msra.mxu0 0
      %1372 = vmatprep.subr.bf16.mxu0 0
      %1373 = vmatpush1.bf16.msra.mxu0 0
      %1374 = vmatprep.subr.bf16.mxu0 0
      %1375 = vmatpush1.bf16.msra.mxu0 0
      %1376 = vmatprep.subr.bf16.mxu0 0
      %1377 = vmatpush1.bf16.msra.mxu0 0
      %1378 = vmatprep.subr.bf16.mxu0 0
      %1379 = vmatpush1.bf16.msra.mxu0 0
      %1380 = vmatprep.subr.bf16.mxu0 0
      %1381 = vmatpush1.bf16.msra.mxu0 0
      %1382 = vmatprep.subr.bf16.mxu0 0
      %1383 = vmatpush1.bf16.msra.mxu0 %v1363
      %1384 = vmatprep.subr.bf16.mxu0 0
      %1385 = vmatpush2.bf16.msra.mxu0 0
      %1386 = vmatprep.subr.bf16.mxu0 0
      %1387 = vmatpush2.bf16.msra.mxu0 0
      %1388 = vmatprep.subr.bf16.mxu0 0
      %1389 = vmatpush2.bf16.msra.mxu0 0
      %1390 = vmatprep.subr.bf16.mxu0 0
      %1391 = vmatpush2.bf16.msra.mxu0 0
      %1392 = vmatprep.subr.bf16.mxu0 0
      %1393 = vmatpush2.bf16.msra.mxu0 0
      %1394 = vmatprep.subr.bf16.mxu0 0
      %1395 = vmatpush2.bf16.msra.mxu0 0
      %1396 = vmatprep.subr.bf16.mxu0 0
      %1397 = vmatpush2.bf16.msra.mxu0 0
      %1398 = vmatprep.subr.bf16.mxu0 0
      %1399 = vmatpush2.bf16.msra.mxu0 0
      %1400 = vmatprep.mubr.bf16.mxu0 0
      %1401 = vmatmul.mubr.bf16.gmra.mxu0 %v1366
      %v1402 = vpop.f32.mrf.mxu0
      %v1403 = vadd.f32 %v1353, %v1402
      %v1404 = vpop.f32.mrf.mxu0
      %v1405 = vpop.f32.mrf.mxu0
      %v1406 = vadd.f32 %v1356, %v1405
      %v1407 = vpop.f32.mrf.mxu0
      %1408 = vdwg.mxu0
      %v1409 = vld [vmem:[%s821] sm:$0x1]
      %v1411 = vlaneseq
      %v1412 = vshrl.u32 %v1411, 7
      %v1413 = vsub.s32 0, %v1412
      %v1414 = vrot.slane %v1409, %v1413
      %v1416 = vadd.f32 %v1403, %v1414
      %v1417 = vadd.f32 %v1406, %v1414
      %v1418 = vadd.f32 %v1416, %v983
      %v1419 = vadd.f32 %v1417, %v984
      %v1420 = vld [vmem:[%s824] sm:$0x1]
      %v1421 = vld [vmem:[%s827] sm:$0x1]
      %v1422 = vsel %vm1009, %v1418, 0.0
      %1423 = vadd.xlane.f32.xlu0 %v1422
      %v1424 = vpop.xlane.xlu0 %1423
      %v1425 = vsel %vm1009, %v1419, 0.0
      %1426 = vadd.xlane.f32.xlu0 %v1425
      %v1427 = vpop.xlane.xlu0 %1426
      %v1428 = vrcp.pop 32.0
      %v1429 = vmul.f32 %v1424, %v1428
      %v1430 = vmul.f32 %v1427, %v1428
      %v1431 = vsub.f32 %v1418, %v1429
      %v1432 = vsub.f32 %v1419, %v1430
      %v1433 = vmul.f32 %v1431, %v1431
      %v1434 = vmul.f32 %v1432, %v1432
      %v1435 = vsel %vm1009, %v1433, 0.0
      %1436 = vadd.xlane.f32.xlu0 %v1435
      %v1437 = vpop.xlane.xlu0 %1436
      %v1438 = vsel %vm1009, %v1434, 0.0
      %1439 = vadd.xlane.f32.xlu0 %v1438
      %v1440 = vpop.xlane.xlu0 %1439
      %v1441 = vmul.f32 %v1437, %v1428
      %v1442 = vmul.f32 %v1440, %v1428
      %v1443 = vadd.f32 %v1441, 1e-12
      %v1444 = vadd.f32 %v1442, 1e-12
      %v1445 = vrsqrt.pop %v1443
      %v1446 = vrsqrt.pop %v1444
      %v1447 = vmul.f32 %v1431, %v1445
      %v1448 = vmul.f32 %v1432, %v1446
      %v1450 = vlaneseq
      %v1451 = vshrl.u32 %v1450, 7
      %v1452 = vsub.s32 0, %v1451
      %v1453 = vrot.slane %v1420, %v1452
      %v1455 = vmul.f32 %v1447, %v1453
      %v1456 = vmul.f32 %v1448, %v1453
      %v1458 = vlaneseq
      %v1459 = vshrl.u32 %v1458, 7
      %v1460 = vsub.s32 0, %v1459
      %v1461 = vrot.slane %v1421, %v1460
      %v1463 = vadd.f32 %v1455, %v1461
      %v1464 = vadd.f32 %v1456, %v1461
      %v1465 = vpack.c.bf16 %v1464, %v1463
      %v1466 = vld [vmem:[%s832] sm:$0xf]
      %v1467 = vld [vmem:[%s832 + $0x4] sm:$0xf]
      %v1468 = vld [vmem:[%s832 + $0x8] sm:$0xf]
      %v1469 = vld [vmem:[%s832 + $0xc] sm:$0xf]
      %v1470 = vld [vmem:[%s835] sm:$0x1]
      %v1472 = vlaneseq
      %v1473 = vshrl.u32 %v1472, 7
      %v1474 = vsub.s32 0, %v1473
      %v1475 = vrot.slane %v1470, %v1474
      %v1481 = vunpack.c.l.b16 %v1466
      %v1482 = vunpack.c.l.b16 %v1467
      %v1483 = vunpack.c.l.b16 %v1468
      %v1484 = vunpack.c.l.b16 %v1469
      %v1485 = vpack.c.b16 %v1482, %v1481
      %v1486 = vpack.c.b16 %v1484, %v1483
      %v1490 = vsel %vm1009, %v1465, 0
      %1492 = vmatprep.subr.bf16.mxu0 0
      %1493 = vmatpush1.bf16.msra.mxu0 0
      %1494 = vmatprep.subr.bf16.mxu0 0
      %1495 = vmatpush1.bf16.msra.mxu0 0
      %1496 = vmatprep.subr.bf16.mxu0 0
      %1497 = vmatpush1.bf16.msra.mxu0 0
      %1498 = vmatprep.subr.bf16.mxu0 0
      %1499 = vmatpush1.bf16.msra.mxu0 0
      %1500 = vmatprep.subr.bf16.mxu0 0
      %1501 = vmatpush1.bf16.msra.mxu0 0
      %1502 = vmatprep.subr.bf16.mxu0 0
      %1503 = vmatpush1.bf16.msra.mxu0 0
      %1504 = vmatprep.subr.bf16.mxu0 0
      %1505 = vmatpush1.bf16.msra.mxu0 %v1486
      %1506 = vmatprep.subr.bf16.mxu0 0
      %1507 = vmatpush1.bf16.msra.mxu0 %v1485
      %1508 = vmatprep.subr.bf16.mxu0 0
      %1509 = vmatpush2.bf16.msra.mxu0 0
      %1510 = vmatprep.subr.bf16.mxu0 0
      %1511 = vmatpush2.bf16.msra.mxu0 0
      %1512 = vmatprep.subr.bf16.mxu0 0
      %1513 = vmatpush2.bf16.msra.mxu0 0
      %1514 = vmatprep.subr.bf16.mxu0 0
      %1515 = vmatpush2.bf16.msra.mxu0 0
      %1516 = vmatprep.subr.bf16.mxu0 0
      %1517 = vmatpush2.bf16.msra.mxu0 0
      %1518 = vmatprep.subr.bf16.mxu0 0
      %1519 = vmatpush2.bf16.msra.mxu0 0
      %1520 = vmatprep.subr.bf16.mxu0 0
      %1521 = vmatpush2.bf16.msra.mxu0 0
      %1522 = vmatprep.subr.bf16.mxu0 0
      %1523 = vmatpush2.bf16.msra.mxu0 0
      %1524 = vmatprep.mubr.bf16.mxu0 0
      %1525 = vmatmul.mubr.bf16.gmra.mxu0 %v1490
      %v1526 = vpop.f32.mrf.mxu0
      %v1527 = vadd.f32 %v1475, %v1526
      %v1528 = vpop.f32.mrf.mxu0
      %v1529 = vpop.f32.mrf.mxu0
      %v1530 = vadd.f32 %v1475, %v1529
      %v1531 = vpop.f32.mrf.mxu0
      %1532 = vdwg.mxu0
      %v1533 = vmul.f32 %v1527, %v1527
      %v1534 = vmul.f32 %v1530, %v1530
      %v1535 = vmul.f32 %v1527, %v1533
      %v1536 = vmul.f32 %v1530, %v1534
      %v1537 = vmul.f32 %v1535, 0.044715
      %v1538 = vmul.f32 %v1536, 0.044715
      %v1539 = vadd.f32 %v1527, %v1537
      %v1540 = vadd.f32 %v1530, %v1538
      %v1541 = vmul.f32 %v1539, 0.7978846
      %v1542 = vmul.f32 %v1540, 0.7978846
      %v1543 = vtanh.pop %v1541
      %v1544 = vtanh.pop %v1542
      %v1545 = vadd.f32 %v1543, 1.0
      %v1546 = vadd.f32 %v1544, 1.0
      %v1547 = vmul.f32 %v1545, 0.5
      %v1548 = vmul.f32 %v1546, 0.5
      %v1549 = vmul.f32 %v1527, %v1547
      %v1550 = vmul.f32 %v1530, %v1548
      %v1551 = vpack.c.bf16 %v1550, %v1549
      %v1552 = vld [vmem:[%s840] sm:$0xf]
      %v1553 = vld [vmem:[%s840 + $0x4] sm:$0xf]
      %v1554 = vld [vmem:[%s840 + $0x8] sm:$0xf]
      %v1555 = vld [vmem:[%s840 + $0xc] sm:$0xf]
      %v1556 = vld [vmem:[%s840 + $0x10] sm:$0xf]
      %v1557 = vld [vmem:[%s840 + $0x14] sm:$0xf]
      %v1558 = vld [vmem:[%s840 + $0x18] sm:$0xf]
      %v1559 = vld [vmem:[%s840 + $0x1c] sm:$0xf]
      %v1560 = vld [vmem:[%s843] sm:$0x1]
      %v1562 = vlaneseq
      %v1563 = vshrl.u32 %v1562, 7
      %v1564 = vsub.s32 0, %v1563
      %v1565 = vrot.slane %v1560, %v1564
      %v1575 = vunpack.c.l.b16 %v1552
      %v1576 = vunpack.c.l.b16 %v1553
      %v1577 = vunpack.c.l.b16 %v1554
      %v1578 = vunpack.c.l.b16 %v1555
      %v1579 = vunpack.c.l.b16 %v1556
      %v1580 = vunpack.c.l.b16 %v1557
      %v1581 = vunpack.c.l.b16 %v1558
      %v1582 = vunpack.c.l.b16 %v1559
      %v1583 = vpack.c.b16 %v1576, %v1575
      %v1584 = vpack.c.b16 %v1578, %v1577
      %v1585 = vpack.c.b16 %v1580, %v1579
      %v1586 = vpack.c.b16 %v1582, %v1581
      %vm1591 = vcmask 523264
      %v1593 = vsel %vm1591, %v1551, 0
      %1595 = vmatprep.subr.bf16.mxu0 0
      %1596 = vmatpush1.bf16.msra.mxu0 0
      %1597 = vmatprep.subr.bf16.mxu0 0
      %1598 = vmatpush1.bf16.msra.mxu0 0
      %1599 = vmatprep.subr.bf16.mxu0 0
      %1600 = vmatpush1.bf16.msra.mxu0 0
      %1601 = vmatprep.subr.bf16.mxu0 0
      %1602 = vmatpush1.bf16.msra.mxu0 0
      %1603 = vmatprep.subr.bf16.mxu0 0
      %1604 = vmatpush1.bf16.msra.mxu0 %v1586
      %1605 = vmatprep.subr.bf16.mxu0 0
      %1606 = vmatpush1.bf16.msra.mxu0 %v1585
      %1607 = vmatprep.subr.bf16.mxu0 0
      %1608 = vmatpush1.bf16.msra.mxu0 %v1584
      %1609 = vmatprep.subr.bf16.mxu0 0
      %1610 = vmatpush1.bf16.msra.mxu0 %v1583
      %1611 = vmatprep.subr.bf16.mxu0 0
      %1612 = vmatpush2.bf16.msra.mxu0 0
      %1613 = vmatprep.subr.bf16.mxu0 0
      %1614 = vmatpush2.bf16.msra.mxu0 0
      %1615 = vmatprep.subr.bf16.mxu0 0
      %1616 = vmatpush2.bf16.msra.mxu0 0
      %1617 = vmatprep.subr.bf16.mxu0 0
      %1618 = vmatpush2.bf16.msra.mxu0 0
      %1619 = vmatprep.subr.bf16.mxu0 0
      %1620 = vmatpush2.bf16.msra.mxu0 0
      %1621 = vmatprep.subr.bf16.mxu0 0
      %1622 = vmatpush2.bf16.msra.mxu0 0
      %1623 = vmatprep.subr.bf16.mxu0 0
      %1624 = vmatpush2.bf16.msra.mxu0 0
      %1625 = vmatprep.subr.bf16.mxu0 0
      %1626 = vmatpush2.bf16.msra.mxu0 0
      %1627 = vmatprep.mubr.bf16.mxu0 0
      %1628 = vmatmul.mubr.bf16.gmra.mxu0 %v1593
      %v1629 = vpop.f32.mrf.mxu0
      %v1630 = vadd.f32 %v1565, %v1629
      %v1631 = vpop.f32.mrf.mxu0
      %v1632 = vpop.f32.mrf.mxu0
      %v1633 = vadd.f32 %v1565, %v1632
      %v1634 = vpop.f32.mrf.mxu0
      %1635 = vdwg.mxu0
      %v1636 = vadd.f32 %v1630, %v1463
      %v1637 = vadd.f32 %v1633, %v1464
      %v1638 = vld [vmem:[%s846] sm:$0x1]
      %v1639 = vld [vmem:[%s849] sm:$0x1]
      %v1640 = vsel %vm1009, %v1636, 0.0
      %1641 = vadd.xlane.f32.xlu0 %v1640
      %v1642 = vpop.xlane.xlu0 %1641
      %v1643 = vsel %vm1009, %v1637, 0.0
      %1644 = vadd.xlane.f32.xlu0 %v1643
      %v1645 = vpop.xlane.xlu0 %1644
      %v1646 = vmul.f32 %v1642, %v1428
      %v1647 = vmul.f32 %v1645, %v1428
      %v1648 = vsub.f32 %v1636, %v1646
      %v1649 = vsub.f32 %v1637, %v1647
      %v1650 = vmul.f32 %v1648, %v1648
      %v1651 = vmul.f32 %v1649, %v1649
      %v1652 = vsel %vm1009, %v1650, 0.0
      %1653 = vadd.xlane.f32.xlu0 %v1652
      %v1654 = vpop.xlane.xlu0 %1653
      %v1655 = vsel %vm1009, %v1651, 0.0
      %1656 = vadd.xlane.f32.xlu0 %v1655
      %v1657 = vpop.xlane.xlu0 %1656
      %v1658 = vmul.f32 %v1654, %v1428
      %v1659 = vmul.f32 %v1657, %v1428
      %v1660 = vadd.f32 %v1658, 1e-12
      %v1661 = vadd.f32 %v1659, 1e-12
      %v1662 = vrsqrt.pop %v1660
      %v1663 = vrsqrt.pop %v1661
      %v1664 = vmul.f32 %v1648, %v1662
      %v1665 = vmul.f32 %v1649, %v1663
      %v1667 = vlaneseq
      %v1668 = vshrl.u32 %v1667, 7
      %v1669 = vsub.s32 0, %v1668
      %v1670 = vrot.slane %v1638, %v1669
      %v1672 = vmul.f32 %v1664, %v1670
      %v1673 = vmul.f32 %v1665, %v1670
      %v1675 = vlaneseq
      %v1676 = vshrl.u32 %v1675, 7
      %v1677 = vsub.s32 0, %v1676
      %v1678 = vrot.slane %v1639, %v1677
      %v1680 = vadd.f32 %v1672, %v1678
      %v1681 = vadd.f32 %v1673, %v1678
      %1682 = vst.msk [vmem:[#allocation2] sm:$0xff] %vm1009, %v1680
      %1683 = vst.msk [vmem:[#allocation2 + $0x8] sm:$0xff] %vm1009, %v1681
      %p1684 = scmp.eq.s32.totalorder %s42, 1
      // Predicated region
      $region113: #{survey_classifier_forward.1} parent=107 // pred_check
        %p1685 = pneg %p1684
      $region114: #{survey_classifier_forward.1} parent=107 // pred_check_branch
        %1687 = sbr.rel (%p1685) target = $region116
      $region115: #{survey_classifier_forward.1} parent=107 // pred_region
        %v1688 = vld [vmem:[#allocation2] sm:$0xff]
        %v1689 = vld [vmem:[#allocation2 + $0x8] sm:$0xff]
        %v1691 = vrot.slane %v1689, 7
        %vm1693 = vcmask 1040384
        %v1694 = vsel %vm1693, %v1688, %v1691
        %v1695 = vpack.c.bf16 %v1694, %v1694
        %v1696 = vld [vmem:[%s19] sm:$0xf]
        %v1697 = vld [vmem:[%s19 + $0x4] sm:$0xf]
        %v1698 = vld [vmem:[%s19 + $0x8] sm:$0xf]
        %v1699 = vld [vmem:[%s19 + $0xc] sm:$0xf]
        %v1700 = vld [vmem:[%s20] sm:$0x1]
        %v1702 = vlaneseq
        %v1703 = vshrl.u32 %v1702, 7
        %v1704 = vsub.s32 0, %v1703
        %v1705 = vrot.slane %v1700, %v1704
        %v1711 = vunpack.c.l.b16 %v1696
        %v1712 = vunpack.c.l.b16 %v1697
        %v1713 = vunpack.c.l.b16 %v1698
        %v1714 = vunpack.c.l.b16 %v1699
        %v1715 = vpack.c.b16 %v1712, %v1711
        %v1716 = vpack.c.b16 %v1714, %v1713
        %v1720 = vsel %vm1009, %v1695, 0
        %1722 = vmatprep.subr.bf16.mxu0 0
        %1723 = vmatpush1.bf16.msra.mxu0 0
        %1724 = vmatprep.subr.bf16.mxu0 0
        %1725 = vmatpush1.bf16.msra.mxu0 0
        %1726 = vmatprep.subr.bf16.mxu0 0
        %1727 = vmatpush1.bf16.msra.mxu0 0
        %1728 = vmatprep.subr.bf16.mxu0 0
        %1729 = vmatpush1.bf16.msra.mxu0 0
        %1730 = vmatprep.subr.bf16.mxu0 0
        %1731 = vmatpush1.bf16.msra.mxu0 0
        %1732 = vmatprep.subr.bf16.mxu0 0
        %1733 = vmatpush1.bf16.msra.mxu0 0
        %1734 = vmatprep.subr.bf16.mxu0 0
        %1735 = vmatpush1.bf16.msra.mxu0 %v1716
        %1736 = vmatprep.subr.bf16.mxu0 0
        %1737 = vmatpush1.bf16.msra.mxu0 %v1715
        %1738 = vmatprep.subr.bf16.mxu0 0
        %1739 = vmatpush2.bf16.msra.mxu0 0
        %1740 = vmatprep.subr.bf16.mxu0 0
        %1741 = vmatpush2.bf16.msra.mxu0 0
        %1742 = vmatprep.subr.bf16.mxu0 0
        %1743 = vmatpush2.bf16.msra.mxu0 0
        %1744 = vmatprep.subr.bf16.mxu0 0
        %1745 = vmatpush2.bf16.msra.mxu0 0
        %1746 = vmatprep.subr.bf16.mxu0 0
        %1747 = vmatpush2.bf16.msra.mxu0 0
        %1748 = vmatprep.subr.bf16.mxu0 0
        %1749 = vmatpush2.bf16.msra.mxu0 0
        %1750 = vmatprep.subr.bf16.mxu0 0
        %1751 = vmatpush2.bf16.msra.mxu0 0
        %1752 = vmatprep.subr.bf16.mxu0 0
        %1753 = vmatpush2.bf16.msra.mxu0 0
        %1754 = vmatprep.mubr.bf16.mxu0 0
        %1755 = vmatmul.mubr.bf16.gmra.mxu0 %v1720
        %v1756 = vpop.f32.mrf.mxu0
        %v1757 = vadd.f32 %v1705, %v1756
        %v1758 = vpop.f32.mrf.mxu0
        %v1759 = vpop.f32.mrf.mxu0
        %v1760 = vpop.f32.mrf.mxu0
        %1761 = vdwg.mxu0
        %v1762 = vtanh.pop %v1757
        %v1763 = vld [vmem:[%s21] sm:$0x1]
        %v1765 = vlaneseq
        %v1766 = vshrl.u32 %v1765, 7
        %v1767 = vsub.s32 0, %v1766
        %v1768 = vrot.slane %v1763, %v1767
        %v1770 = vmul.f32 %v1762, %v1768
        %vm1771 = vcmask 254976
        %v1772 = vsel %vm1771, %v1770, 0.0
        %1773 = vadd.xlane.f32.xlu0 %v1772
        %v1774 = vpop.xlane.xlu0 %1773
        %v1775 = vld [vmem:[#allocation5] sm:$0x1]
        %v1777 = vlaneseq
        %v1778 = vshrl.u32 %v1777, 7
        %v1779 = vsub.s32 0, %v1778
        %v1780 = vrot.slane %v1775, %v1779
        %v1782 = vadd.f32 %v1774, %v1780
        %vm1783 = vcmask 1024
        %1784 = vst.msk [vmem:[%s23] sm:$0x3] %vm1783, %v1782
      $region116: #{survey_classifier_forward.1} parent=107 // pred_fallthru
        _
      // Predicated region
      $region117: #{survey_classifier_forward.1} parent=107 // pred_check
        %p1785 = pneg %p577
      $region118: #{survey_classifier_forward.1} parent=107 // pred_check_branch
        %1787 = sbr.rel (%p1785) target = $region120
      $region119: #{survey_classifier_forward.1} parent=107 // pred_region
        _
      $region120: #{survey_classifier_forward.1} parent=107 // pred_fallthru
        _
      // Predicated region
      $region121: #{survey_classifier_forward.1} parent=107 // pred_check
        %p1788 = pneg %p577
      $region122: #{survey_classifier_forward.1} parent=107 // pred_check_branch
        %1790 = sbr.rel (%p1788) target = $region124
      $region123: #{survey_classifier_forward.1} parent=107 // pred_region
        _
      $region124: #{survey_classifier_forward.1} parent=107 // pred_fallthru
        _
    $region108: #{survey_classifier_forward.1} parent=5 // pred_fallthru
      _
    %p1791 = scmp.le.s32.totalorder 2, %s37
    // Predicated region
    $region125: #{survey_classifier_forward.1} parent=5 // pred_check
      %p1792 = pneg %p1791
    $region126: #{survey_classifier_forward.1} parent=5 // pred_check_branch
      %1794 = sbr.rel (%p1792) target = $region128
    $region127: #{survey_classifier_forward.1} parent=5 // pred_region
      %s1795 = ssub.s32 %s37, 2
    $region128: #{survey_classifier_forward.1} parent=5 // pred_fallthru
      _
  $region6: #{survey_classifier_forward.1} parent=0 // loop_footer
    %s41 = sadd.s32 1, %s37
  $region7: #{survey_classifier_forward.1} parent=0 // loop_footer_branch
    %36 = sbr.rel target = $region3
  $region8: #{survey_classifier_forward.1} parent=0 // loop_exit
    _

</llo_original>
